<compile_context>
chip_gen: v7x
topology: tpu7x:2x2x1
jax: 0.10.0
libtpu: 0.0.40
codegen_flags: <defaults>
</compile_context>

<pallas_src>
import numpy as np
import jax
import jax.numpy as jnp
from jax import lax
from jax.experimental import pallas as pl
from jax.experimental.pallas import tpu as pltpu

TILE_B = 32  # default images per grid step (tunable; any multiple of 8)


def _ceil_to(x, m):
    return ((x + m - 1) // m) * m


# ------------------------------ Pallas kernel ------------------------------ #

def _femnist_kernel(x_ref, w1_ref, b1_ref, w2_ref, b2_ref,
                    f1w_ref, f1b_ref, f2w_ref, f2b_ref, f3w_ref, f3b_ref,
                    out_ref):
    f32 = jnp.float32
    bf16 = jnp.bfloat16
    tb = out_ref.shape[0]                 # images in this tile
    x = x_ref[...]                        # (28*tb, 28) bf16, row = img_row*tb + b

    # ---- conv1 (1->6, 5x5, valid) as ONE wide-K matmul (K = 5*28 = 140) -----
    # x5[i*tb+b, di*28+k] = x[b, i+di, k]; only valid output rows (i < 24) built.
    x5 = jnp.concatenate([x[di * tb:(di + 24) * tb, :] for di in range(5)], axis=1)
    y1 = jnp.dot(x5, w1_ref[...], preferred_element_type=f32) + b1_ref[...]
    y1 = jnp.maximum(y1, 0.0)             # (24*tb, 256); col = (j%2)*128 + (j//2)*6 + c

    # ---- maxpool 2x2: aligned row-slab maxes, then the two 128-lane halves ---
    p1 = jnp.concatenate(
        [jnp.maximum(y1[(2 * i) * tb:(2 * i + 1) * tb, :],
                     y1[(2 * i + 1) * tb:(2 * i + 2) * tb, :]) for i in range(12)],
        axis=0)                           # (12*tb, 256)
    p1 = jnp.maximum(p1[:, :128], p1[:, 128:]).astype(bf16)   # (12*tb,128), lane j'*6+c

    # ---- conv2 (6->16, 5x5, valid) as ONE wide-K matmul (K = 5*128 = 640) ----
    x5b = jnp.concatenate([p1[di * tb:(di + 8) * tb, :] for di in range(5)], axis=1)
    y2 = jnp.dot(x5b, w2_ref[...], preferred_element_type=f32) + b2_ref[...]
    y2 = jnp.maximum(y2, 0.0)             # (8*tb, 256); col = (j%2)*128 + (j//2)*16 + co

    p2 = jnp.concatenate(
        [jnp.maximum(y2[(2 * i) * tb:(2 * i + 1) * tb, :],
                     y2[(2 * i + 1) * tb:(2 * i + 2) * tb, :]) for i in range(4)],
        axis=0)                           # (4*tb, 256)
    p2 = jnp.maximum(p2[:, :128], p2[:, 128:]).astype(bf16)   # (4*tb,128), lane j''*16+co

    # ---- flatten (torch NCHW order folded into f1w) + fc1/fc2/fc3 ------------
    flat = jnp.concatenate([p2[ip * tb:(ip + 1) * tb, :] for ip in range(4)], axis=1)
    h1 = jnp.maximum(jnp.dot(flat, f1w_ref[...], preferred_element_type=f32)
                     + f1b_ref[...], 0.0).astype(bf16)
    h2 = jnp.maximum(jnp.dot(h1, f2w_ref[...], preferred_element_type=f32)
                     + f2b_ref[...], 0.0).astype(bf16)
    out = jnp.dot(h2, f3w_ref[...], preferred_element_type=f32) + f3b_ref[...]
    out_ref[...] = out.astype(out_ref.dtype)


# -------------------------- parameter preparation -------------------------- #

def init_params(key):
    """Deterministic synthetic params with the same shapes as the PyTorch module."""
    ks = jax.random.split(key, 10)

    def u(k, shape, fan_in):
        bound = 1.0 / jnp.sqrt(float(fan_in))
        return jax.random.uniform(k, shape, jnp.float32, -bound, bound)

    return {
        "conv1_w": u(ks[0], (6, 1, 5, 5), 1 * 5 * 5),   # (Cout, Cin, KH, KW)
        "conv1_b": u(ks[1], (6,), 1 * 5 * 5),
        "conv2_w": u(ks[2], (16, 6, 5, 5), 6 * 5 * 5),
        "conv2_b": u(ks[3], (16,), 6 * 5 * 5),
        "fc1_w": u(ks[4], (120, 256), 256),             # (out, in) like nn.Linear
        "fc1_b": u(ks[5], (120,), 256),
        "fc2_w": u(ks[6], (84, 120), 120),
        "fc2_b": u(ks[7], (84,), 120),
        "fc3_w": u(ks[8], (62, 84), 84),
        "fc3_b": u(ks[9], (62,), 84),
    }


def prepare_params(params):
    """Re-lay weights into wide-K band matrices consumed by the fused kernel.
    None of these depend on the batch tile size."""
    f32 = np.float32
    w1 = np.asarray(params["conv1_w"], f32)   # (6,1,5,5)
    b1 = np.asarray(params["conv1_b"], f32)
    w2 = np.asarray(params["conv2_w"], f32)   # (16,6,5,5)
    b2 = np.asarray(params["conv2_b"], f32)

    # conv1 band: X5[r, di*28 + m] = x[b, i+di, m]; out col = (j%2)*128 + (j//2)*6 + c
    w1band = np.zeros((140, 256), f32)
    b1band = np.zeros((1, 256), f32)
    for j in range(24):
        for c in range(6):
            col = (j % 2) * 128 + (j // 2) * 6 + c
            b1band[0, col] = b1[c]
            for di in range(5):
                for dk in range(5):
                    w1band[di * 28 + j + dk, col] = w1[c, 0, di, dk]

    # conv2 band: X5b[r, di*128 + jk*6 + ci] = pool1[b, ci, i+di, jk];
    # out col = (j%2)*128 + (j//2)*16 + co
    w2band = np.zeros((640, 256), f32)
    b2band = np.zeros((1, 256), f32)
    for j in range(8):
        for co in range(16):
            col = (j % 2) * 128 + (j // 2) * 16 + co
            b2band[0, col] = b2[co]
            for di in range(5):
                for dk in range(5):
                    for ci in range(6):
                        w2band[di * 128 + (j + dk) * 6 + ci, col] = w2[co, ci, di, dk]

    # fc1: flat lane = ip*128 + j*16 + co  <->  torch flatten index co*16 + ip*4 + j
    fc1t = np.asarray(params["fc1_w"], f32).T          # (256, 120)
    f1w = np.zeros((512, 120), f32)
    for ip in range(4):
        for j in range(4):
            for co in range(16):
                f1w[ip * 128 + j * 16 + co, :] = fc1t[co * 16 + ip * 4 + j, :]
    f1b = np.asarray(params["fc1_b"], f32).reshape(1, 120)

    f2w = np.asarray(params["fc2_w"], f32).T           # (120, 84)
    f2b = np.asarray(params["fc2_b"], f32).reshape(1, 84)
    f3w = np.zeros((84, 128), f32)
    f3w[:, :62] = np.asarray(params["fc3_w"], f32).T
    f3b = np.zeros((1, 128), f32)
    f3b[0, :62] = np.asarray(params["fc3_b"], f32)

    bf16 = jnp.bfloat16
    return (jnp.asarray(w1band, bf16), jnp.asarray(b1band, jnp.float32),
            jnp.asarray(w2band, bf16), jnp.asarray(b2band, jnp.float32),
            jnp.asarray(f1w, bf16), jnp.asarray(f1b, jnp.float32),
            jnp.asarray(f2w, bf16), jnp.asarray(f2b, jnp.float32),
            jnp.asarray(f3w, bf16), jnp.asarray(f3b, jnp.float32))


# --------------------------------- wrapper ---------------------------------- #

def femnist_forward(prep, x_nchw, tile_b=None):
    """x_nchw: (B, 1, 28, 28) float32. Returns (B, 62) logits (float32)."""
    B = x_nchw.shape[0]
    if tile_b is None:
        tile_b = min(TILE_B, _ceil_to(B, 8))
    tile_b = max(8, _ceil_to(tile_b, 8))
    bpad = _ceil_to(B, tile_b)
    nt = bpad // tile_b            # for v7x megacore, keep >= 2 steps at large B

    x = x_nchw.reshape(B, 28, 28).astype(jnp.bfloat16)
    if bpad != B:
        x = jnp.pad(x, ((0, bpad - B), (0, 0), (0, 0)))
    # Per-tile (row, batch) transpose so every in-kernel row slice is tb-aligned:
    # global row = tile*28*tb + img_row*tb + b.
    x2d = x.reshape(nt, tile_b, 28, 28).transpose(0, 2, 1, 3).reshape(nt * 28 * tile_b, 28)

    in_specs = [pl.BlockSpec((28 * tile_b, 28), lambda i: (i, 0))]
    for arr in prep:               # constants: fetched once, VMEM-resident
        nd = arr.ndim
        in_specs.append(pl.BlockSpec(arr.shape, lambda i, _nd=nd: (0,) * _nd))

    out = pl.pallas_call(
        _femnist_kernel,
        out_shape=jax.ShapeDtypeStruct((bpad, 128), jnp.float32),
        grid=(nt,),
        in_specs=in_specs,
        out_specs=pl.BlockSpec((tile_b, 128), lambda i: (i, 0)),
        compiler_params=pltpu.CompilerParams(
            dimension_semantics=("parallel",),
            vmem_limit_bytes=32 * 1024 * 1024),
    )(x2d, *prep)
    return out[:B, :62]


# ------------------------- pure-JAX reference check ------------------------- #

def reference_forward(params, x_nchw):
    hp = lax.Precision.HIGHEST
    c1 = lax.conv_general_dilated(x_nchw, params["conv1_w"], (1, 1), "VALID",
                                  dimension_numbers=("NCHW", "OIHW", "NCHW"),
                                  precision=hp)
    c1 = jnp.maximum(c1 + params["conv1_b"][None, :, None, None], 0.0)
    p1 = c1.reshape(c1.shape[0], 6, 12, 2, 12, 2).max(axis=(3, 5))
    c2 = lax.conv_general_dilated(p1, params["conv2_w"], (1, 1), "VALID",
                                  dimension_numbers=("NCHW", "OIHW", "NCHW"),
                                  precision=hp)
    c2 = jnp.maximum(c2 + params["conv2_b"][None, :, None, None], 0.0)
    p2 = c2.reshape(c2.shape[0], 16, 4, 2, 4, 2).max(axis=(3, 5))
    flat = p2.reshape(p2.shape[0], 256)          # torch.flatten(x, 1) on NCHW
    h = jnp.maximum(jnp.dot(flat, params["fc1_w"].T, precision=hp) + params["fc1_b"], 0.0)
    h = jnp.maximum(jnp.dot(h, params["fc2_w"].T, precision=hp) + params["fc2_b"], 0.0)
    return jnp.dot(h, params["fc3_w"].T, precision=hp) + params["fc3_b"]


if __name__ == "__main__":
    key = jax.random.PRNGKey(0)
    pkey, xkey, xkey2 = jax.random.split(key, 3)
    params = init_params(pkey)
    prep = prepare_params(params)
    fwd = jax.jit(femnist_forward, static_argnames=("tile_b",))

    # FEMNIST input is 1x28x28 (28x28 required so fc1's 256-dim input lines up).
    # Check 1: tiny batch, single grid step.
    x = jax.random.normal(xkey, (2, 1, 28, 28), jnp.float32)
    out = jax.block_until_ready(fwd(prep, x, tile_b=8))
    assert out.shape == (2, 62) and out.dtype == jnp.float32
    ref = reference_forward(params, x)
    err = float(jnp.max(jnp.abs(out - ref)))
    assert err < 5e-2, f"mismatch vs reference (B=2): {err}"

    # Check 2: multi-tile path with batch padding (B=20 -> 3 tiles of 8).
    x2 = jax.random.normal(xkey2, (20, 1, 28, 28), jnp.float32)
    out2 = jax.block_until_ready(fwd(prep, x2, tile_b=8))
    ref2 = reference_forward(params, x2)
    err2 = float(jnp.max(jnp.abs(out2 - ref2)))
    assert err2 < 5e-2, f"mismatch vs reference (B=20): {err2}"

    print("KERNEL_OK")
</pallas_src>

<mosaic_0001>
module attributes {stable_mosaic.version = 11 : i64} {
  func.func @_femnist_kernel(%arg0: i32, %arg1: memref<224x28xbf16, #tpu.memory_space<vmem>>, %arg2: memref<140x256xbf16, #tpu.memory_space<vmem>>, %arg3: memref<1x256xf32, #tpu.memory_space<vmem>>, %arg4: memref<640x256xbf16, #tpu.memory_space<vmem>>, %arg5: memref<1x256xf32, #tpu.memory_space<vmem>>, %arg6: memref<512x120xbf16, #tpu.memory_space<vmem>>, %arg7: memref<1x120xf32, #tpu.memory_space<vmem>>, %arg8: memref<120x84xbf16, #tpu.memory_space<vmem>>, %arg9: memref<1x84xf32, #tpu.memory_space<vmem>>, %arg10: memref<84x128xbf16, #tpu.memory_space<vmem>>, %arg11: memref<1x128xf32, #tpu.memory_space<vmem>>, %arg12: memref<8x128xf32, #tpu.memory_space<vmem>>) attributes {dimension_semantics = [#tpu.dimension_semantics<parallel>], iteration_bounds = array<i64: 1>, scalar_prefetch = 0 : i64, scratch_operands = 0 : i64, tpu.core_type = #tpu.core_type<tc>, window_params = [{transform_indices = @transform_0, window_bounds = array<i64: 224, 28>}, {pipeline_mode = #tpu.pipeline_mode<synchronous>, transform_indices = @transform_1, window_bounds = array<i64: 140, 256>}, {pipeline_mode = #tpu.pipeline_mode<synchronous>, transform_indices = @transform_2, window_bounds = array<i64: 1, 256>}, {pipeline_mode = #tpu.pipeline_mode<synchronous>, transform_indices = @transform_3, window_bounds = array<i64: 640, 256>}, {pipeline_mode = #tpu.pipeline_mode<synchronous>, transform_indices = @transform_4, window_bounds = array<i64: 1, 256>}, {pipeline_mode = #tpu.pipeline_mode<synchronous>, transform_indices = @transform_5, window_bounds = array<i64: 512, 120>}, {pipeline_mode = #tpu.pipeline_mode<synchronous>, transform_indices = @transform_6, window_bounds = array<i64: 1, 120>}, {pipeline_mode = #tpu.pipeline_mode<synchronous>, transform_indices = @transform_7, window_bounds = array<i64: 120, 84>}, {pipeline_mode = #tpu.pipeline_mode<synchronous>, transform_indices = @transform_8, window_bounds = array<i64: 1, 84>}, {pipeline_mode = #tpu.pipeline_mode<synchronous>, transform_indices = @transform_9, window_bounds = array<i64: 84, 128>}, {pipeline_mode = #tpu.pipeline_mode<synchronous>, transform_indices = @transform_10, window_bounds = array<i64: 1, 128>}, {transform_indices = @transform_11, window_bounds = array<i64: 8, 128>}]} {
    %c0 = arith.constant 0 : index
    %c0_0 = arith.constant 0 : index
    %0 = vector.load %arg1[%c0, %c0_0] : memref<224x28xbf16, #tpu.memory_space<vmem>>, vector<224x28xbf16>
    %1 = vector.extract_strided_slice %0 {offsets = [0, 0], sizes = [192, 28], strides = [1, 1]} : vector<224x28xbf16> to vector<192x28xbf16>
    %2 = vector.extract_strided_slice %0 {offsets = [8, 0], sizes = [192, 28], strides = [1, 1]} : vector<224x28xbf16> to vector<192x28xbf16>
    %3 = vector.extract_strided_slice %0 {offsets = [16, 0], sizes = [192, 28], strides = [1, 1]} : vector<224x28xbf16> to vector<192x28xbf16>
    %4 = vector.extract_strided_slice %0 {offsets = [24, 0], sizes = [192, 28], strides = [1, 1]} : vector<224x28xbf16> to vector<192x28xbf16>
    %5 = vector.extract_strided_slice %0 {offsets = [32, 0], sizes = [192, 28], strides = [1, 1]} : vector<224x28xbf16> to vector<192x28xbf16>
    %6 = tpu.concatenate %1, %2, %3, %4, %5 in 1 : vector<192x28xbf16>, vector<192x28xbf16>, vector<192x28xbf16>, vector<192x28xbf16>, vector<192x28xbf16> -> vector<192x140xbf16>
    %c0_1 = arith.constant 0 : index
    %c0_2 = arith.constant 0 : index
    %7 = vector.load %arg2[%c0_1, %c0_2] : memref<140x256xbf16, #tpu.memory_space<vmem>>, vector<140x256xbf16>
    %cst = arith.constant dense<0.000000e+00> : vector<192x256xf32>
    %8 = tpu.matmul %6, %7, %cst {dimension_numbers = #tpu.dot_dimension_numbers<[1], [0], [0], [1], [0, 0, 1, 1], [], []>} : vector<192x140xbf16>, vector<140x256xbf16>, vector<192x256xf32> -> vector<192x256xf32>
    %c0_3 = arith.constant 0 : index
    %c0_4 = arith.constant 0 : index
    %9 = vector.load %arg3[%c0_3, %c0_4] : memref<1x256xf32, #tpu.memory_space<vmem>>, vector<1x256xf32>
    %10 = vector.broadcast %9 : vector<1x256xf32> to vector<192x256xf32>
    %11 = arith.addf %8, %10 : vector<192x256xf32>
    %cst_5 = arith.constant 0.000000e+00 : f32
    %12 = vector.broadcast %cst_5 : f32 to vector<192x256xf32>
    %13 = arith.maximumf %11, %12 : vector<192x256xf32>
    %14 = vector.extract_strided_slice %13 {offsets = [0, 0], sizes = [8, 256], strides = [1, 1]} : vector<192x256xf32> to vector<8x256xf32>
    %15 = vector.extract_strided_slice %13 {offsets = [8, 0], sizes = [8, 256], strides = [1, 1]} : vector<192x256xf32> to vector<8x256xf32>
    %16 = arith.maximumf %14, %15 : vector<8x256xf32>
    %17 = vector.extract_strided_slice %13 {offsets = [16, 0], sizes = [8, 256], strides = [1, 1]} : vector<192x256xf32> to vector<8x256xf32>
    %18 = vector.extract_strided_slice %13 {offsets = [24, 0], sizes = [8, 256], strides = [1, 1]} : vector<192x256xf32> to vector<8x256xf32>
    %19 = arith.maximumf %17, %18 : vector<8x256xf32>
    %20 = vector.extract_strided_slice %13 {offsets = [32, 0], sizes = [8, 256], strides = [1, 1]} : vector<192x256xf32> to vector<8x256xf32>
    %21 = vector.extract_strided_slice %13 {offsets = [40, 0], sizes = [8, 256], strides = [1, 1]} : vector<192x256xf32> to vector<8x256xf32>
    %22 = arith.maximumf %20, %21 : vector<8x256xf32>
    %23 = vector.extract_strided_slice %13 {offsets = [48, 0], sizes = [8, 256], strides = [1, 1]} : vector<192x256xf32> to vector<8x256xf32>
    %24 = vector.extract_strided_slice %13 {offsets = [56, 0], sizes = [8, 256], strides = [1, 1]} : vector<192x256xf32> to vector<8x256xf32>
    %25 = arith.maximumf %23, %24 : vector<8x256xf32>
    %26 = vector.extract_strided_slice %13 {offsets = [64, 0], sizes = [8, 256], strides = [1, 1]} : vector<192x256xf32> to vector<8x256xf32>
    %27 = vector.extract_strided_slice %13 {offsets = [72, 0], sizes = [8, 256], strides = [1, 1]} : vector<192x256xf32> to vector<8x256xf32>
    %28 = arith.maximumf %26, %27 : vector<8x256xf32>
    %29 = vector.extract_strided_slice %13 {offsets = [80, 0], sizes = [8, 256], strides = [1, 1]} : vector<192x256xf32> to vector<8x256xf32>
    %30 = vector.extract_strided_slice %13 {offsets = [88, 0], sizes = [8, 256], strides = [1, 1]} : vector<192x256xf32> to vector<8x256xf32>
    %31 = arith.maximumf %29, %30 : vector<8x256xf32>
    %32 = vector.extract_strided_slice %13 {offsets = [96, 0], sizes = [8, 256], strides = [1, 1]} : vector<192x256xf32> to vector<8x256xf32>
    %33 = vector.extract_strided_slice %13 {offsets = [104, 0], sizes = [8, 256], strides = [1, 1]} : vector<192x256xf32> to vector<8x256xf32>
    %34 = arith.maximumf %32, %33 : vector<8x256xf32>
    %35 = vector.extract_strided_slice %13 {offsets = [112, 0], sizes = [8, 256], strides = [1, 1]} : vector<192x256xf32> to vector<8x256xf32>
    %36 = vector.extract_strided_slice %13 {offsets = [120, 0], sizes = [8, 256], strides = [1, 1]} : vector<192x256xf32> to vector<8x256xf32>
    %37 = arith.maximumf %35, %36 : vector<8x256xf32>
    %38 = vector.extract_strided_slice %13 {offsets = [128, 0], sizes = [8, 256], strides = [1, 1]} : vector<192x256xf32> to vector<8x256xf32>
    %39 = vector.extract_strided_slice %13 {offsets = [136, 0], sizes = [8, 256], strides = [1, 1]} : vector<192x256xf32> to vector<8x256xf32>
    %40 = arith.maximumf %38, %39 : vector<8x256xf32>
    %41 = vector.extract_strided_slice %13 {offsets = [144, 0], sizes = [8, 256], strides = [1, 1]} : vector<192x256xf32> to vector<8x256xf32>
    %42 = vector.extract_strided_slice %13 {offsets = [152, 0], sizes = [8, 256], strides = [1, 1]} : vector<192x256xf32> to vector<8x256xf32>
    %43 = arith.maximumf %41, %42 : vector<8x256xf32>
    %44 = vector.extract_strided_slice %13 {offsets = [160, 0], sizes = [8, 256], strides = [1, 1]} : vector<192x256xf32> to vector<8x256xf32>
    %45 = vector.extract_strided_slice %13 {offsets = [168, 0], sizes = [8, 256], strides = [1, 1]} : vector<192x256xf32> to vector<8x256xf32>
    %46 = arith.maximumf %44, %45 : vector<8x256xf32>
    %47 = vector.extract_strided_slice %13 {offsets = [176, 0], sizes = [8, 256], strides = [1, 1]} : vector<192x256xf32> to vector<8x256xf32>
    %48 = vector.extract_strided_slice %13 {offsets = [184, 0], sizes = [8, 256], strides = [1, 1]} : vector<192x256xf32> to vector<8x256xf32>
    %49 = arith.maximumf %47, %48 : vector<8x256xf32>
    %50 = tpu.concatenate %16, %19, %22, %25, %28, %31, %34, %37, %40, %43, %46, %49 in 0 : vector<8x256xf32>, vector<8x256xf32>, vector<8x256xf32>, vector<8x256xf32>, vector<8x256xf32>, vector<8x256xf32>, vector<8x256xf32>, vector<8x256xf32>, vector<8x256xf32>, vector<8x256xf32>, vector<8x256xf32>, vector<8x256xf32> -> vector<96x256xf32>
    %51 = vector.extract_strided_slice %50 {offsets = [0, 0], sizes = [96, 128], strides = [1, 1]} : vector<96x256xf32> to vector<96x128xf32>
    %52 = vector.extract_strided_slice %50 {offsets = [0, 128], sizes = [96, 128], strides = [1, 1]} : vector<96x256xf32> to vector<96x128xf32>
    %53 = arith.maximumf %51, %52 : vector<96x128xf32>
    %54 = arith.truncf %53 : vector<96x128xf32> to vector<96x128xbf16>
    %55 = vector.extract_strided_slice %54 {offsets = [0, 0], sizes = [64, 128], strides = [1, 1]} : vector<96x128xbf16> to vector<64x128xbf16>
    %56 = vector.extract_strided_slice %54 {offsets = [8, 0], sizes = [64, 128], strides = [1, 1]} : vector<96x128xbf16> to vector<64x128xbf16>
    %57 = vector.extract_strided_slice %54 {offsets = [16, 0], sizes = [64, 128], strides = [1, 1]} : vector<96x128xbf16> to vector<64x128xbf16>
    %58 = vector.extract_strided_slice %54 {offsets = [24, 0], sizes = [64, 128], strides = [1, 1]} : vector<96x128xbf16> to vector<64x128xbf16>
    %59 = vector.extract_strided_slice %54 {offsets = [32, 0], sizes = [64, 128], strides = [1, 1]} : vector<96x128xbf16> to vector<64x128xbf16>
    %60 = tpu.concatenate %55, %56, %57, %58, %59 in 1 : vector<64x128xbf16>, vector<64x128xbf16>, vector<64x128xbf16>, vector<64x128xbf16>, vector<64x128xbf16> -> vector<64x640xbf16>
    %c0_6 = arith.constant 0 : index
    %c0_7 = arith.constant 0 : index
    %61 = vector.load %arg4[%c0_6, %c0_7] : memref<640x256xbf16, #tpu.memory_space<vmem>>, vector<640x256xbf16>
    %cst_8 = arith.constant dense<0.000000e+00> : vector<64x256xf32>
    %62 = tpu.matmul %60, %61, %cst_8 {dimension_numbers = #tpu.dot_dimension_numbers<[1], [0], [0], [1], [0, 0, 1, 1], [], []>} : vector<64x640xbf16>, vector<640x256xbf16>, vector<64x256xf32> -> vector<64x256xf32>
    %c0_9 = arith.constant 0 : index
    %c0_10 = arith.constant 0 : index
    %63 = vector.load %arg5[%c0_9, %c0_10] : memref<1x256xf32, #tpu.memory_space<vmem>>, vector<1x256xf32>
    %64 = vector.broadcast %63 : vector<1x256xf32> to vector<64x256xf32>
    %65 = arith.addf %62, %64 : vector<64x256xf32>
    %cst_11 = arith.constant 0.000000e+00 : f32
    %66 = vector.broadcast %cst_11 : f32 to vector<64x256xf32>
    %67 = arith.maximumf %65, %66 : vector<64x256xf32>
    %68 = vector.extract_strided_slice %67 {offsets = [0, 0], sizes = [8, 256], strides = [1, 1]} : vector<64x256xf32> to vector<8x256xf32>
    %69 = vector.extract_strided_slice %67 {offsets = [8, 0], sizes = [8, 256], strides = [1, 1]} : vector<64x256xf32> to vector<8x256xf32>
    %70 = arith.maximumf %68, %69 : vector<8x256xf32>
    %71 = vector.extract_strided_slice %67 {offsets = [16, 0], sizes = [8, 256], strides = [1, 1]} : vector<64x256xf32> to vector<8x256xf32>
    %72 = vector.extract_strided_slice %67 {offsets = [24, 0], sizes = [8, 256], strides = [1, 1]} : vector<64x256xf32> to vector<8x256xf32>
    %73 = arith.maximumf %71, %72 : vector<8x256xf32>
    %74 = vector.extract_strided_slice %67 {offsets = [32, 0], sizes = [8, 256], strides = [1, 1]} : vector<64x256xf32> to vector<8x256xf32>
    %75 = vector.extract_strided_slice %67 {offsets = [40, 0], sizes = [8, 256], strides = [1, 1]} : vector<64x256xf32> to vector<8x256xf32>
    %76 = arith.maximumf %74, %75 : vector<8x256xf32>
    %77 = vector.extract_strided_slice %67 {offsets = [48, 0], sizes = [8, 256], strides = [1, 1]} : vector<64x256xf32> to vector<8x256xf32>
    %78 = vector.extract_strided_slice %67 {offsets = [56, 0], sizes = [8, 256], strides = [1, 1]} : vector<64x256xf32> to vector<8x256xf32>
    %79 = arith.maximumf %77, %78 : vector<8x256xf32>
    %80 = tpu.concatenate %70, %73, %76, %79 in 0 : vector<8x256xf32>, vector<8x256xf32>, vector<8x256xf32>, vector<8x256xf32> -> vector<32x256xf32>
    %81 = vector.extract_strided_slice %80 {offsets = [0, 0], sizes = [32, 128], strides = [1, 1]} : vector<32x256xf32> to vector<32x128xf32>
    %82 = vector.extract_strided_slice %80 {offsets = [0, 128], sizes = [32, 128], strides = [1, 1]} : vector<32x256xf32> to vector<32x128xf32>
    %83 = arith.maximumf %81, %82 : vector<32x128xf32>
    %84 = arith.truncf %83 : vector<32x128xf32> to vector<32x128xbf16>
    %85 = vector.extract_strided_slice %84 {offsets = [0, 0], sizes = [8, 128], strides = [1, 1]} : vector<32x128xbf16> to vector<8x128xbf16>
    %86 = vector.extract_strided_slice %84 {offsets = [8, 0], sizes = [8, 128], strides = [1, 1]} : vector<32x128xbf16> to vector<8x128xbf16>
    %87 = vector.extract_strided_slice %84 {offsets = [16, 0], sizes = [8, 128], strides = [1, 1]} : vector<32x128xbf16> to vector<8x128xbf16>
    %88 = vector.extract_strided_slice %84 {offsets = [24, 0], sizes = [8, 128], strides = [1, 1]} : vector<32x128xbf16> to vector<8x128xbf16>
    %89 = tpu.concatenate %85, %86, %87, %88 in 1 : vector<8x128xbf16>, vector<8x128xbf16>, vector<8x128xbf16>, vector<8x128xbf16> -> vector<8x512xbf16>
    %c0_12 = arith.constant 0 : index
    %c0_13 = arith.constant 0 : index
    %90 = vector.load %arg6[%c0_12, %c0_13] : memref<512x120xbf16, #tpu.memory_space<vmem>>, vector<512x120xbf16>
    %cst_14 = arith.constant dense<0.000000e+00> : vector<8x120xf32>
    %91 = tpu.matmul %89, %90, %cst_14 {dimension_numbers = #tpu.dot_dimension_numbers<[1], [0], [0], [1], [0, 0, 1, 1], [], []>} : vector<8x512xbf16>, vector<512x120xbf16>, vector<8x120xf32> -> vector<8x120xf32>
    %c0_15 = arith.constant 0 : index
    %c0_16 = arith.constant 0 : index
    %92 = vector.load %arg7[%c0_15, %c0_16] : memref<1x120xf32, #tpu.memory_space<vmem>>, vector<1x120xf32>
    %93 = vector.broadcast %92 : vector<1x120xf32> to vector<8x120xf32>
    %94 = arith.addf %91, %93 : vector<8x120xf32>
    %cst_17 = arith.constant 0.000000e+00 : f32
    %95 = vector.broadcast %cst_17 : f32 to vector<8x120xf32>
    %96 = arith.maximumf %94, %95 : vector<8x120xf32>
    %97 = arith.truncf %96 : vector<8x120xf32> to vector<8x120xbf16>
    %c0_18 = arith.constant 0 : index
    %c0_19 = arith.constant 0 : index
    %98 = vector.load %arg8[%c0_18, %c0_19] : memref<120x84xbf16, #tpu.memory_space<vmem>>, vector<120x84xbf16>
    %cst_20 = arith.constant dense<0.000000e+00> : vector<8x84xf32>
    %99 = tpu.matmul %97, %98, %cst_20 {dimension_numbers = #tpu.dot_dimension_numbers<[1], [0], [0], [1], [0, 0, 1, 1], [], []>} : vector<8x120xbf16>, vector<120x84xbf16>, vector<8x84xf32> -> vector<8x84xf32>
    %c0_21 = arith.constant 0 : index
    %c0_22 = arith.constant 0 : index
    %100 = vector.load %arg9[%c0_21, %c0_22] : memref<1x84xf32, #tpu.memory_space<vmem>>, vector<1x84xf32>
    %101 = vector.broadcast %100 : vector<1x84xf32> to vector<8x84xf32>
    %102 = arith.addf %99, %101 : vector<8x84xf32>
    %cst_23 = arith.constant 0.000000e+00 : f32
    %103 = vector.broadcast %cst_23 : f32 to vector<8x84xf32>
    %104 = arith.maximumf %102, %103 : vector<8x84xf32>
    %105 = arith.truncf %104 : vector<8x84xf32> to vector<8x84xbf16>
    %c0_24 = arith.constant 0 : index
    %c0_25 = arith.constant 0 : index
    %106 = vector.load %arg10[%c0_24, %c0_25] : memref<84x128xbf16, #tpu.memory_space<vmem>>, vector<84x128xbf16>
    %cst_26 = arith.constant dense<0.000000e+00> : vector<8x128xf32>
    %107 = tpu.matmul %105, %106, %cst_26 {dimension_numbers = #tpu.dot_dimension_numbers<[1], [0], [0], [1], [0, 0, 1, 1], [], []>} : vector<8x84xbf16>, vector<84x128xbf16>, vector<8x128xf32> -> vector<8x128xf32>
    %c0_27 = arith.constant 0 : index
    %c0_28 = arith.constant 0 : index
    %108 = vector.load %arg11[%c0_27, %c0_28] : memref<1x128xf32, #tpu.memory_space<vmem>>, vector<1x128xf32>
    %109 = vector.broadcast %108 : vector<1x128xf32> to vector<8x128xf32>
    %110 = arith.addf %107, %109 : vector<8x128xf32>
    %c0_29 = arith.constant 0 : index
    %c0_30 = arith.constant 0 : index
    %111 = vector.load %arg12[%c0_29, %c0_30] : memref<8x128xf32, #tpu.memory_space<vmem>>, vector<8x128xf32>
    tpu.vector_store %arg12[%c0_29, %c0_30], %110 {strides = array<i32>} : memref<8x128xf32, #tpu.memory_space<vmem>>, vector<8x128xf32>,
    return
  }
  func.func @transform_0(%arg0: i32) -> (i32, i32) {
    %c0_i32 = arith.constant 0 : i32
    %c0_i32_0 = arith.constant 0 : i32
    return %arg0, %c0_i32 : i32, i32
  }
  func.func @transform_1(%arg0: i32) -> (i32, i32) {
    %c0_i32 = arith.constant 0 : i32
    %c0_i32_0 = arith.constant 0 : i32
    %c0_i32_1 = arith.constant 0 : i32
    return %c0_i32, %c0_i32_0 : i32, i32
  }
  func.func @transform_2(%arg0: i32) -> (i32, i32) {
    %c0_i32 = arith.constant 0 : i32
    %c0_i32_0 = arith.constant 0 : i32
    %c0_i32_1 = arith.constant 0 : i32
    return %c0_i32, %c0_i32_0 : i32, i32
  }
  func.func @transform_3(%arg0: i32) -> (i32, i32) {
    %c0_i32 = arith.constant 0 : i32
    %c0_i32_0 = arith.constant 0 : i32
    %c0_i32_1 = arith.constant 0 : i32
    return %c0_i32, %c0_i32_0 : i32, i32
  }
  func.func @transform_4(%arg0: i32) -> (i32, i32) {
    %c0_i32 = arith.constant 0 : i32
    %c0_i32_0 = arith.constant 0 : i32
    %c0_i32_1 = arith.constant 0 : i32
    return %c0_i32, %c0_i32_0 : i32, i32
  }
  func.func @transform_5(%arg0: i32) -> (i32, i32) {
    %c0_i32 = arith.constant 0 : i32
    %c0_i32_0 = arith.constant 0 : i32
    %c0_i32_1 = arith.constant 0 : i32
    return %c0_i32, %c0_i32_0 : i32, i32
  }
  func.func @transform_6(%arg0: i32) -> (i32, i32) {
    %c0_i32 = arith.constant 0 : i32
    %c0_i32_0 = arith.constant 0 : i32
    %c0_i32_1 = arith.constant 0 : i32
    return %c0_i32, %c0_i32_0 : i32, i32
  }
  func.func @transform_7(%arg0: i32) -> (i32, i32) {
    %c0_i32 = arith.constant 0 : i32
    %c0_i32_0 = arith.constant 0 : i32
    %c0_i32_1 = arith.constant 0 : i32
    return %c0_i32, %c0_i32_0 : i32, i32
  }
  func.func @transform_8(%arg0: i32) -> (i32, i32) {
    %c0_i32 = arith.constant 0 : i32
    %c0_i32_0 = arith.constant 0 : i32
    %c0_i32_1 = arith.constant 0 : i32
    return %c0_i32, %c0_i32_0 : i32, i32
  }
  func.func @transform_9(%arg0: i32) -> (i32, i32) {
    %c0_i32 = arith.constant 0 : i32
    %c0_i32_0 = arith.constant 0 : i32
    %c0_i32_1 = arith.constant 0 : i32
    return %c0_i32, %c0_i32_0 : i32, i32
  }
  func.func @transform_10(%arg0: i32) -> (i32, i32) {
    %c0_i32 = arith.constant 0 : i32
    %c0_i32_0 = arith.constant 0 : i32
    %c0_i32_1 = arith.constant 0 : i32
    return %c0_i32, %c0_i32_0 : i32, i32
  }
  func.func @transform_11(%arg0: i32) -> (i32, i32) {
    %c0_i32 = arith.constant 0 : i32
    %c0_i32_0 = arith.constant 0 : i32
    return %arg0, %c0_i32 : i32, i32
  }
}

</mosaic_0001>

<llo_original>
// kernel: femnist_forward.1
$region0: #{femnist_forward.1}
  #allocation0 [shape = 'u32[]', space=smem, size = 0x4, offset = 0x4, fixed_abs, tag = 'smem constant byte address 0x4 - core index']
  #allocation1 [shape = 'u32[144,128]{1,0:T(1,128)}', space=vmem, size = 0x12000, scoped, tag = 'internal scratch']
  %s0 = inlined_call_operand.vmem [shape: bf16[224,28], index: 0, kind: input, shape index: {}]
  %s1 = inlined_call_operand.hbm [shape: bf16[140,256], index: 1, kind: input, shape index: {}]
  %s2 = inlined_call_operand.vmem [shape: f32[1,256], index: 2, kind: input, shape index: {}]
  %s3 = inlined_call_operand.vmem [shape: bf16[640,256], index: 3, kind: input, shape index: {}]
  %s4 = inlined_call_operand.vmem [shape: f32[1,256], index: 4, kind: input, shape index: {}]
  %s5 = inlined_call_operand.vmem [shape: bf16[512,120], index: 5, kind: input, shape index: {}]
  %s6 = inlined_call_operand.vmem [shape: f32[1,120], index: 6, kind: input, shape index: {}]
  %s7 = inlined_call_operand.vmem [shape: bf16[120,84], index: 7, kind: input, shape index: {}]
  %s8 = inlined_call_operand.vmem [shape: f32[1,84], index: 8, kind: input, shape index: {}]
  %s9 = inlined_call_operand.vmem [shape: bf16[84,128], index: 9, kind: input, shape index: {}]
  %s10 = inlined_call_operand.vmem [shape: f32[1,128], index: 10, kind: input, shape index: {}]
  %s11 = inlined_call_operand.vmem [shape: f32[8,128], index: 11, kind: output, shape index: {}]
  %s12 = sld [smem:[#allocation0]]
  $region58: #{femnist_forward.1} parent=0
    _
  %s14 = ssub.s32 1, %s12
  %s15 = scalar_select 0, %s14, %s12
  $region1: #{femnist_forward.1} parent=0
    #allocation2 [shape = 'u8[73728]{0}', space=vmem, size = 0x12000, scoped, tag = 'input window, operand 1, single buffered']
    #allocation3 [shape = 's32[1]{0}', space=sflag, size = 0x4, scoped, tag = 'scoped memory for femnist_forward.1']
    %16 = vsyncpa [#allocation3], 0
    // Predicated region
    $region2: #{femnist_forward.1} parent=1 // pred_check
      _
    $region3: #{femnist_forward.1} parent=1 // pred_check_branch
      %18 = sbr.rel (0) target = $region5
    $region4: #{femnist_forward.1} parent=1 // pred_region
      _
    $region5: #{femnist_forward.1} parent=1 // pred_fallthru
      _
    // Predicated region
    $region6: #{femnist_forward.1} parent=1 // pred_check
      _
    $region7: #{femnist_forward.1} parent=1 // pred_check_branch
      %20 = sbr.rel (0) target = $region9
    $region8: #{femnist_forward.1} parent=1 // pred_region
      %s22 = ssub.s32 2304, 2304
      %23 = vsyncadd [#allocation3], %s22
      %s24 = sshll.u32 [#allocation2], 4
      %s25 = int_to_ptr.vmem [resolvable:$true] %s24
      %30 = dma.hbm_to_vmem [thread:$0]  %s1, 2304, %s25, [#allocation3], 128, 128, 8
    $region9: #{femnist_forward.1} parent=1 // pred_fallthru
      _
    // Predicated region
    $region10: #{femnist_forward.1} parent=1 // pred_check
      _
    $region11: #{femnist_forward.1} parent=1 // pred_check_branch
      %32 = sbr.rel (0) target = $region13
    $region12: #{femnist_forward.1} parent=1 // pred_region
      _
    $region13: #{femnist_forward.1} parent=1 // pred_fallthru
      _
    // Predicated region
    $region14: #{femnist_forward.1} parent=1 // pred_check
      _
    $region15: #{femnist_forward.1} parent=1 // pred_check_branch
      %34 = sbr.rel (0) target = $region17
    $region16: #{femnist_forward.1} parent=1 // pred_region
      _
    $region17: #{femnist_forward.1} parent=1 // pred_fallthru
      _
    // Predicated region
    $region18: #{femnist_forward.1} parent=1 // pred_check
      _
    $region19: #{femnist_forward.1} parent=1 // pred_check_branch
      %36 = sbr.rel (0) target = $region21
    $region20: #{femnist_forward.1} parent=1 // pred_region
      _
    $region21: #{femnist_forward.1} parent=1 // pred_fallthru
      _
    // Predicated region
    $region22: #{femnist_forward.1} parent=1 // pred_check
      _
    $region23: #{femnist_forward.1} parent=1 // pred_check_branch
      %38 = sbr.rel (0) target = $region25
    $region24: #{femnist_forward.1} parent=1 // pred_region
      _
    $region25: #{femnist_forward.1} parent=1 // pred_fallthru
      _
    // Predicated region
    $region26: #{femnist_forward.1} parent=1 // pred_check
      _
    $region27: #{femnist_forward.1} parent=1 // pred_check_branch
      %40 = sbr.rel (0) target = $region29
    $region28: #{femnist_forward.1} parent=1 // pred_region
      _
    $region29: #{femnist_forward.1} parent=1 // pred_fallthru
      _
    // Predicated region
    $region30: #{femnist_forward.1} parent=1 // pred_check
      _
    $region31: #{femnist_forward.1} parent=1 // pred_check_branch
      %42 = sbr.rel (0) target = $region33
    $region32: #{femnist_forward.1} parent=1 // pred_region
      _
    $region33: #{femnist_forward.1} parent=1 // pred_fallthru
      _
    // Predicated region
    $region34: #{femnist_forward.1} parent=1 // pred_check
      _
    $region35: #{femnist_forward.1} parent=1 // pred_check_branch
      %44 = sbr.rel (0) target = $region37
    $region36: #{femnist_forward.1} parent=1 // pred_region
      _
    $region37: #{femnist_forward.1} parent=1 // pred_fallthru
      _
    // Predicated region
    $region38: #{femnist_forward.1} parent=1 // pred_check
      _
    $region39: #{femnist_forward.1} parent=1 // pred_check_branch
      %46 = sbr.rel (0) target = $region41
    $region40: #{femnist_forward.1} parent=1 // pred_region
      _
    $region41: #{femnist_forward.1} parent=1 // pred_fallthru
      _
    // Predicated region
    $region42: #{femnist_forward.1} parent=1 // pred_check
      _
    $region43: #{femnist_forward.1} parent=1 // pred_check_branch
      %48 = sbr.rel (0) target = $region45
    $region44: #{femnist_forward.1} parent=1 // pred_region
      _
    $region45: #{femnist_forward.1} parent=1 // pred_fallthru
      _
    // Predicated region
    $region46: #{femnist_forward.1} parent=1 // pred_check
      _
    $region47: #{femnist_forward.1} parent=1 // pred_check_branch
      %50 = sbr.rel (0) target = $region49
    $region48: #{femnist_forward.1} parent=1 // pred_region
      %51 = dma.done [#allocation3], 2304
    $region49: #{femnist_forward.1} parent=1 // pred_fallthru
      _
    %v53 = vld [vmem:[%s0] sm:$0xf]
    %v54 = vld [vmem:[%s0 + $0x4] sm:$0xf]
    %v55 = vld [vmem:[%s0 + $0x8] sm:$0xf]
    %v56 = vld [vmem:[%s0 + $0xc] sm:$0xf]
    %v57 = vld [vmem:[%s0 + $0x10] sm:$0xf]
    %v58 = vld [vmem:[%s0 + $0x14] sm:$0xf]
    %v59 = vld [vmem:[%s0 + $0x18] sm:$0xf]
    %v60 = vld [vmem:[%s0 + $0x1c] sm:$0xf]
    %v61 = vld [vmem:[%s0 + $0x20] sm:$0xf]
    %v62 = vld [vmem:[%s0 + $0x24] sm:$0xf]
    %v63 = vld [vmem:[%s0 + $0x28] sm:$0xf]
    %v64 = vld [vmem:[%s0 + $0x2c] sm:$0xf]
    %v65 = vld [vmem:[%s0 + $0x30] sm:$0xf]
    %v66 = vld [vmem:[%s0 + $0x34] sm:$0xf]
    %v67 = vld [vmem:[%s0 + $0x38] sm:$0xf]
    %v68 = vld [vmem:[%s0 + $0x3c] sm:$0xf]
    %v69 = vld [vmem:[%s0 + $0x40] sm:$0xf]
    %v70 = vld [vmem:[%s0 + $0x44] sm:$0xf]
    %v71 = vld [vmem:[%s0 + $0x48] sm:$0xf]
    %v72 = vld [vmem:[%s0 + $0x4c] sm:$0xf]
    %v73 = vld [vmem:[%s0 + $0x50] sm:$0xf]
    %v74 = vld [vmem:[%s0 + $0x54] sm:$0xf]
    %v75 = vld [vmem:[%s0 + $0x58] sm:$0xf]
    %v76 = vld [vmem:[%s0 + $0x5c] sm:$0xf]
    %v77 = vld [vmem:[%s0 + $0x60] sm:$0xf]
    %v78 = vld [vmem:[%s0 + $0x64] sm:$0xf]
    %v79 = vld [vmem:[%s0 + $0x68] sm:$0xf]
    %v80 = vld [vmem:[%s0 + $0x6c] sm:$0xf]
    %v105 = vunpack.c.l.b16 %v53
    %v106 = vunpack.c.l.b16 %v54
    %v107 = vunpack.c.l.b16 %v55
    %v108 = vunpack.c.l.b16 %v56
    %v109 = vunpack.c.l.b16 %v57
    %v110 = vunpack.c.l.b16 %v58
    %v111 = vunpack.c.l.b16 %v59
    %v112 = vunpack.c.l.b16 %v60
    %v113 = vunpack.c.l.b16 %v61
    %v114 = vunpack.c.l.b16 %v62
    %v115 = vunpack.c.l.b16 %v63
    %v116 = vunpack.c.l.b16 %v64
    %v117 = vunpack.c.l.b16 %v65
    %v118 = vunpack.c.l.b16 %v66
    %v119 = vunpack.c.l.b16 %v67
    %v120 = vunpack.c.l.b16 %v68
    %v121 = vunpack.c.l.b16 %v69
    %v122 = vunpack.c.l.b16 %v70
    %v123 = vunpack.c.l.b16 %v71
    %v124 = vunpack.c.l.b16 %v72
    %v125 = vunpack.c.l.b16 %v73
    %v126 = vunpack.c.l.b16 %v74
    %v127 = vunpack.c.l.b16 %v75
    %v128 = vunpack.c.l.b16 %v76
    %v129 = vpack.c.b16 %v106, %v105
    %v130 = vpack.c.b16 %v108, %v107
    %v131 = vpack.c.b16 %v110, %v109
    %v132 = vpack.c.b16 %v112, %v111
    %v133 = vpack.c.b16 %v114, %v113
    %v134 = vpack.c.b16 %v116, %v115
    %v135 = vpack.c.b16 %v118, %v117
    %v136 = vpack.c.b16 %v120, %v119
    %v137 = vpack.c.b16 %v122, %v121
    %v138 = vpack.c.b16 %v124, %v123
    %v139 = vpack.c.b16 %v126, %v125
    %v140 = vpack.c.b16 %v128, %v127
    %v142 = vunpack.c.l.b16 %v77
    %v143 = vpack.c.b16 %v107, %v106
    %v144 = vpack.c.b16 %v109, %v108
    %v145 = vpack.c.b16 %v111, %v110
    %v146 = vpack.c.b16 %v113, %v112
    %v147 = vpack.c.b16 %v115, %v114
    %v148 = vpack.c.b16 %v117, %v116
    %v149 = vpack.c.b16 %v119, %v118
    %v150 = vpack.c.b16 %v121, %v120
    %v151 = vpack.c.b16 %v123, %v122
    %v152 = vpack.c.b16 %v125, %v124
    %v153 = vpack.c.b16 %v127, %v126
    %v154 = vpack.c.b16 %v142, %v128
    %155 = vrot.lane.b32.xlu0 %v143, 28
    %v156 = vpop.permute.xlu0 %155
    %157 = vrot.lane.b32.xlu0 %v144, 28
    %v158 = vpop.permute.xlu0 %157
    %159 = vrot.lane.b32.xlu0 %v145, 28
    %v160 = vpop.permute.xlu0 %159
    %161 = vrot.lane.b32.xlu0 %v146, 28
    %v162 = vpop.permute.xlu0 %161
    %163 = vrot.lane.b32.xlu0 %v147, 28
    %v164 = vpop.permute.xlu0 %163
    %165 = vrot.lane.b32.xlu0 %v148, 28
    %v166 = vpop.permute.xlu0 %165
    %167 = vrot.lane.b32.xlu0 %v149, 28
    %v168 = vpop.permute.xlu0 %167
    %169 = vrot.lane.b32.xlu0 %v150, 28
    %v170 = vpop.permute.xlu0 %169
    %171 = vrot.lane.b32.xlu0 %v151, 28
    %v172 = vpop.permute.xlu0 %171
    %173 = vrot.lane.b32.xlu0 %v152, 28
    %v174 = vpop.permute.xlu0 %173
    %175 = vrot.lane.b32.xlu0 %v153, 28
    %v176 = vpop.permute.xlu0 %175
    %177 = vrot.lane.b32.xlu0 %v154, 28
    %v178 = vpop.permute.xlu0 %177
    %v180 = vunpack.c.l.b16 %v78
    %v181 = vpack.c.b16 %v180, %v142
    %182 = vrot.lane.b32.xlu0 %v130, 56
    %v183 = vpop.permute.xlu0 %182
    %184 = vrot.lane.b32.xlu0 %v131, 56
    %v185 = vpop.permute.xlu0 %184
    %186 = vrot.lane.b32.xlu0 %v132, 56
    %v187 = vpop.permute.xlu0 %186
    %188 = vrot.lane.b32.xlu0 %v133, 56
    %v189 = vpop.permute.xlu0 %188
    %190 = vrot.lane.b32.xlu0 %v134, 56
    %v191 = vpop.permute.xlu0 %190
    %192 = vrot.lane.b32.xlu0 %v135, 56
    %v193 = vpop.permute.xlu0 %192
    %194 = vrot.lane.b32.xlu0 %v136, 56
    %v195 = vpop.permute.xlu0 %194
    %196 = vrot.lane.b32.xlu0 %v137, 56
    %v197 = vpop.permute.xlu0 %196
    %198 = vrot.lane.b32.xlu0 %v138, 56
    %v199 = vpop.permute.xlu0 %198
    %200 = vrot.lane.b32.xlu0 %v139, 56
    %v201 = vpop.permute.xlu0 %200
    %202 = vrot.lane.b32.xlu0 %v140, 56
    %v203 = vpop.permute.xlu0 %202
    %204 = vrot.lane.b32.xlu0 %v181, 56
    %v205 = vpop.permute.xlu0 %204
    %v207 = vunpack.c.l.b16 %v79
    %v208 = vpack.c.b16 %v207, %v180
    %209 = vrot.lane.b32.xlu0 %v144, 84
    %v210 = vpop.permute.xlu0 %209
    %211 = vrot.lane.b32.xlu0 %v145, 84
    %v212 = vpop.permute.xlu0 %211
    %213 = vrot.lane.b32.xlu0 %v146, 84
    %v214 = vpop.permute.xlu0 %213
    %215 = vrot.lane.b32.xlu0 %v147, 84
    %v216 = vpop.permute.xlu0 %215
    %217 = vrot.lane.b32.xlu0 %v148, 84
    %v218 = vpop.permute.xlu0 %217
    %219 = vrot.lane.b32.xlu0 %v149, 84
    %v220 = vpop.permute.xlu0 %219
    %221 = vrot.lane.b32.xlu0 %v150, 84
    %v222 = vpop.permute.xlu0 %221
    %223 = vrot.lane.b32.xlu0 %v151, 84
    %v224 = vpop.permute.xlu0 %223
    %225 = vrot.lane.b32.xlu0 %v152, 84
    %v226 = vpop.permute.xlu0 %225
    %227 = vrot.lane.b32.xlu0 %v153, 84
    %v228 = vpop.permute.xlu0 %227
    %229 = vrot.lane.b32.xlu0 %v154, 84
    %v230 = vpop.permute.xlu0 %229
    %231 = vrot.lane.b32.xlu0 %v208, 84
    %v232 = vpop.permute.xlu0 %231
    %v234 = vunpack.c.l.b16 %v80
    %v235 = vpack.c.b16 %v234, %v207
    %236 = vrot.lane.b32.xlu0 %v131, 112
    %v237 = vpop.permute.xlu0 %236
    %238 = vrot.lane.b32.xlu0 %v132, 112
    %v239 = vpop.permute.xlu0 %238
    %240 = vrot.lane.b32.xlu0 %v133, 112
    %v241 = vpop.permute.xlu0 %240
    %242 = vrot.lane.b32.xlu0 %v134, 112
    %v243 = vpop.permute.xlu0 %242
    %244 = vrot.lane.b32.xlu0 %v135, 112
    %v245 = vpop.permute.xlu0 %244
    %246 = vrot.lane.b32.xlu0 %v136, 112
    %v247 = vpop.permute.xlu0 %246
    %248 = vrot.lane.b32.xlu0 %v137, 112
    %v249 = vpop.permute.xlu0 %248
    %250 = vrot.lane.b32.xlu0 %v138, 112
    %v251 = vpop.permute.xlu0 %250
    %252 = vrot.lane.b32.xlu0 %v139, 112
    %v253 = vpop.permute.xlu0 %252
    %254 = vrot.lane.b32.xlu0 %v140, 112
    %v255 = vpop.permute.xlu0 %254
    %256 = vrot.lane.b32.xlu0 %v181, 112
    %v257 = vpop.permute.xlu0 %256
    %258 = vrot.lane.b32.xlu0 %v235, 112
    %v259 = vpop.permute.xlu0 %258
    %vm260 = vcmask 228352
    %v263 = vsel %vm260, %v129, %v156
    %v266 = vsel %vm260, %v130, %v158
    %v269 = vsel %vm260, %v131, %v160
    %v272 = vsel %vm260, %v132, %v162
    %v275 = vsel %vm260, %v133, %v164
    %v278 = vsel %vm260, %v134, %v166
    %v281 = vsel %vm260, %v135, %v168
    %v284 = vsel %vm260, %v136, %v170
    %v287 = vsel %vm260, %v137, %v172
    %v290 = vsel %vm260, %v138, %v174
    %v293 = vsel %vm260, %v139, %v176
    %v296 = vsel %vm260, %v140, %v178
    %vm297 = vcmask 457728
    %v299 = vsel %vm297, %v263, %v183
    %v301 = vsel %vm297, %v266, %v185
    %v303 = vsel %vm297, %v269, %v187
    %v305 = vsel %vm297, %v272, %v189
    %v307 = vsel %vm297, %v275, %v191
    %v309 = vsel %vm297, %v278, %v193
    %v311 = vsel %vm297, %v281, %v195
    %v313 = vsel %vm297, %v284, %v197
    %v315 = vsel %vm297, %v287, %v199
    %v317 = vsel %vm297, %v290, %v201
    %v319 = vsel %vm297, %v293, %v203
    %v321 = vsel %vm297, %v296, %v205
    %vm322 = vcmask 687104
    %v324 = vsel %vm322, %v299, %v210
    %v326 = vsel %vm322, %v301, %v212
    %v328 = vsel %vm322, %v303, %v214
    %v330 = vsel %vm322, %v305, %v216
    %v332 = vsel %vm322, %v307, %v218
    %v334 = vsel %vm322, %v309, %v220
    %v336 = vsel %vm322, %v311, %v222
    %v338 = vsel %vm322, %v313, %v224
    %v340 = vsel %vm322, %v315, %v226
    %v342 = vsel %vm322, %v317, %v228
    %v344 = vsel %vm322, %v319, %v230
    %v346 = vsel %vm322, %v321, %v232
    %vm347 = vcmask 916480
    %v349 = vsel %vm347, %v324, %v237
    %v352 = vsel %vm347, %v326, %v239
    %v355 = vsel %vm347, %v328, %v241
    %v358 = vsel %vm347, %v330, %v243
    %v361 = vsel %vm347, %v332, %v245
    %v364 = vsel %vm347, %v334, %v247
    %v367 = vsel %vm347, %v336, %v249
    %v370 = vsel %vm347, %v338, %v251
    %v373 = vsel %vm347, %v340, %v253
    %v376 = vsel %vm347, %v342, %v255
    %v379 = vsel %vm347, %v344, %v257
    %v382 = vsel %vm347, %v346, %v259
    %v384 = vld [vmem:[#allocation2] sm:$0xff]
    %v385 = vld [vmem:[#allocation2 + $0x8] sm:$0xff]
    %v386 = vld [vmem:[#allocation2 + $0x10] sm:$0xff]
    %v387 = vld [vmem:[#allocation2 + $0x18] sm:$0xff]
    %v388 = vld [vmem:[#allocation2 + $0x20] sm:$0xff]
    %v389 = vld [vmem:[#allocation2 + $0x28] sm:$0xff]
    %v390 = vld [vmem:[#allocation2 + $0x30] sm:$0xff]
    %v391 = vld [vmem:[#allocation2 + $0x38] sm:$0xff]
    %v392 = vld [vmem:[#allocation2 + $0x40] sm:$0xff]
    %v393 = vld [vmem:[#allocation2 + $0x48] sm:$0xff]
    %v394 = vld [vmem:[#allocation2 + $0x50] sm:$0xff]
    %v395 = vld [vmem:[#allocation2 + $0x58] sm:$0xff]
    %v396 = vld [vmem:[#allocation2 + $0x60] sm:$0xff]
    %v397 = vld [vmem:[#allocation2 + $0x68] sm:$0xff]
    %v398 = vld [vmem:[#allocation2 + $0x70] sm:$0xff]
    %v399 = vld [vmem:[#allocation2 + $0x78] sm:$0xff]
    %v400 = vld [vmem:[#allocation2 + $0x80] sm:$0xff]
    %v401 = vld [vmem:[#allocation2 + $0x88] sm:$0x33]
    %v402 = vld [vmem:[%s2] sm:$0x3]
    %v404 = vlaneseq
    %v405 = vshrl.u32 %v404, 7
    %v406 = vsub.s32 0, %v405
    %v407 = vrot.slane %v402, %v406
    %v408 = vlaneseq
    %v409 = vshrl.u32 %v408, 7
    %v410 = vsub.s32 1, %v409
    %v411 = vrot.slane %v402, %v410
    %v432 = vunpack.c.l.b16 %v384
    %v433 = vunpack.c.h.b16 %v384
    %v434 = vunpack.c.l.b16 %v385
    %v435 = vunpack.c.h.b16 %v385
    %v436 = vunpack.c.l.b16 %v386
    %v437 = vunpack.c.h.b16 %v386
    %v438 = vunpack.c.l.b16 %v387
    %v439 = vunpack.c.h.b16 %v387
    %v440 = vunpack.c.l.b16 %v388
    %v441 = vunpack.c.h.b16 %v388
    %v442 = vunpack.c.l.b16 %v389
    %v443 = vunpack.c.h.b16 %v389
    %v444 = vunpack.c.l.b16 %v390
    %v445 = vunpack.c.h.b16 %v390
    %v446 = vunpack.c.l.b16 %v391
    %v447 = vunpack.c.h.b16 %v391
    %v448 = vunpack.c.l.b16 %v392
    %v449 = vunpack.c.h.b16 %v392
    %v450 = vunpack.c.l.b16 %v393
    %v451 = vunpack.c.h.b16 %v393
    %v452 = vunpack.c.l.b16 %v394
    %v453 = vunpack.c.h.b16 %v394
    %v454 = vunpack.c.l.b16 %v395
    %v455 = vunpack.c.h.b16 %v395
    %v456 = vunpack.c.l.b16 %v396
    %v457 = vunpack.c.h.b16 %v396
    %v458 = vunpack.c.l.b16 %v397
    %v459 = vunpack.c.h.b16 %v397
    %v460 = vunpack.c.l.b16 %v398
    %v461 = vunpack.c.h.b16 %v398
    %v462 = vunpack.c.l.b16 %v399
    %v463 = vunpack.c.h.b16 %v399
    %v464 = vunpack.c.l.b16 %v400
    %v465 = vunpack.c.h.b16 %v400
    %v466 = vunpack.c.l.b16 %v401
    %v467 = vunpack.c.h.b16 %v401
    %v468 = vpack.c.b16 %v434, %v432
    %v469 = vpack.c.b16 %v435, %v433
    %v470 = vpack.c.b16 %v438, %v436
    %v471 = vpack.c.b16 %v439, %v437
    %v472 = vpack.c.b16 %v442, %v440
    %v473 = vpack.c.b16 %v443, %v441
    %v474 = vpack.c.b16 %v446, %v444
    %v475 = vpack.c.b16 %v447, %v445
    %v476 = vpack.c.b16 %v450, %v448
    %v477 = vpack.c.b16 %v451, %v449
    %v478 = vpack.c.b16 %v454, %v452
    %v479 = vpack.c.b16 %v455, %v453
    %v480 = vpack.c.b16 %v458, %v456
    %v481 = vpack.c.b16 %v459, %v457
    %v482 = vpack.c.b16 %v462, %v460
    %v483 = vpack.c.b16 %v463, %v461
    %v484 = vpack.c.b16 %v466, %v464
    %v485 = vpack.c.b16 %v467, %v465
    %vm502 = vcmask 97280
    %v503 = vsel %vm502, %v237, 0
    %v505 = vsel %vm502, %v239, 0
    %v507 = vsel %vm502, %v241, 0
    %v509 = vsel %vm502, %v243, 0
    %v511 = vsel %vm502, %v245, 0
    %v513 = vsel %vm502, %v247, 0
    %v515 = vsel %vm502, %v249, 0
    %v517 = vsel %vm502, %v251, 0
    %v519 = vsel %vm502, %v253, 0
    %v521 = vsel %vm502, %v255, 0
    %v523 = vsel %vm502, %v257, 0
    %v525 = vsel %vm502, %v259, 0
    %vm527 = vcmask 1045504
    %v529 = vsel %vm527, %v484, 0
    %v532 = vsel %vm527, %v485, 0
    %534 = vmatprep.subr.bf16.mxu0 %v469
    %535 = vmatpush1.bf16.msra.mxu0 %v468
    %536 = vmatprep.subr.bf16.mxu0 %v471
    %537 = vmatpush1.bf16.msra.mxu0 %v470
    %538 = vmatprep.subr.bf16.mxu0 %v473
    %539 = vmatpush1.bf16.msra.mxu0 %v472
    %540 = vmatprep.subr.bf16.mxu0 %v475
    %541 = vmatpush1.bf16.msra.mxu0 %v474
    %542 = vmatprep.subr.bf16.mxu0 %v477
    %543 = vmatpush1.bf16.msra.mxu0 %v476
    %544 = vmatprep.subr.bf16.mxu0 %v479
    %545 = vmatpush1.bf16.msra.mxu0 %v478
    %546 = vmatprep.subr.bf16.mxu0 %v481
    %547 = vmatpush1.bf16.msra.mxu0 %v480
    %548 = vmatprep.subr.bf16.mxu0 %v483
    %549 = vmatpush1.bf16.msra.mxu0 %v482
    %550 = vmatprep.subr.bf16.mxu0 %v532
    %551 = vmatpush1.bf16.msra.mxu0 %v529
    %552 = vmatprep.subr.bf16.mxu0 0
    %553 = vmatpush1.bf16.msra.mxu0 0
    %554 = vmatprep.subr.bf16.mxu0 0
    %555 = vmatpush1.bf16.msra.mxu0 0
    %556 = vmatprep.subr.bf16.mxu0 0
    %557 = vmatpush1.bf16.msra.mxu0 0
    %558 = vmatprep.subr.bf16.mxu0 0
    %559 = vmatpush1.bf16.msra.mxu0 0
    %560 = vmatprep.subr.bf16.mxu0 0
    %561 = vmatpush1.bf16.msra.mxu0 0
    %562 = vmatprep.subr.bf16.mxu0 0
    %563 = vmatpush1.bf16.msra.mxu0 0
    %564 = vmatprep.subr.bf16.mxu0 0
    %565 = vmatpush1.bf16.msra.mxu0 0
    %566 = vmatprep.mubr.bf16.mxu0 %v503
    %567 = vmatmul.mubr.bf16.gmra.mrb[0].mxu0 %v349
    %v568 = vpop.f32.mrb[0].mxu0
    %v569 = vadd.f32 %v407, %v568
    %v570 = vpop.f32.mrb[0].mxu0
    %v571 = vadd.f32 %v411, %v570
    %v572 = vpop.f32.mrb[0].mxu0
    %v573 = vadd.f32 %v407, %v572
    %v574 = vpop.f32.mrb[0].mxu0
    %v575 = vadd.f32 %v411, %v574
    %576 = vmatprep.mubr.bf16.mxu0 %v505
    %577 = vmatmul.mubr.bf16.gmra.mrb[0].mxu0 %v352
    %v578 = vpop.f32.mrb[0].mxu0
    %v579 = vadd.f32 %v407, %v578
    %v580 = vpop.f32.mrb[0].mxu0
    %v581 = vadd.f32 %v411, %v580
    %v582 = vpop.f32.mrb[0].mxu0
    %v583 = vadd.f32 %v407, %v582
    %v584 = vpop.f32.mrb[0].mxu0
    %v585 = vadd.f32 %v411, %v584
    %586 = vmatprep.mubr.bf16.mxu0 %v507
    %587 = vmatmul.mubr.bf16.gmra.mrb[0].mxu0 %v355
    %v588 = vpop.f32.mrb[0].mxu0
    %v589 = vadd.f32 %v407, %v588
    %v590 = vpop.f32.mrb[0].mxu0
    %v591 = vadd.f32 %v411, %v590
    %v592 = vpop.f32.mrb[0].mxu0
    %v593 = vadd.f32 %v407, %v592
    %v594 = vpop.f32.mrb[0].mxu0
    %v595 = vadd.f32 %v411, %v594
    %596 = vmatprep.mubr.bf16.mxu0 %v509
    %597 = vmatmul.mubr.bf16.gmra.mrb[0].mxu0 %v358
    %v598 = vpop.f32.mrb[0].mxu0
    %v599 = vadd.f32 %v407, %v598
    %v600 = vpop.f32.mrb[0].mxu0
    %v601 = vadd.f32 %v411, %v600
    %v602 = vpop.f32.mrb[0].mxu0
    %v603 = vadd.f32 %v407, %v602
    %v604 = vpop.f32.mrb[0].mxu0
    %v605 = vadd.f32 %v411, %v604
    %606 = vmatprep.mubr.bf16.mxu0 %v511
    %607 = vmatmul.mubr.bf16.gmra.mrb[0].mxu0 %v361
    %v608 = vpop.f32.mrb[0].mxu0
    %v609 = vadd.f32 %v407, %v608
    %v610 = vpop.f32.mrb[0].mxu0
    %v611 = vadd.f32 %v411, %v610
    %v612 = vpop.f32.mrb[0].mxu0
    %v613 = vadd.f32 %v407, %v612
    %v614 = vpop.f32.mrb[0].mxu0
    %v615 = vadd.f32 %v411, %v614
    %616 = vmatprep.mubr.bf16.mxu0 %v513
    %617 = vmatmul.mubr.bf16.gmra.mrb[0].mxu0 %v364
    %v618 = vpop.f32.mrb[0].mxu0
    %v619 = vadd.f32 %v407, %v618
    %v620 = vpop.f32.mrb[0].mxu0
    %v621 = vadd.f32 %v411, %v620
    %v622 = vpop.f32.mrb[0].mxu0
    %v623 = vadd.f32 %v407, %v622
    %v624 = vpop.f32.mrb[0].mxu0
    %v625 = vadd.f32 %v411, %v624
    %626 = vmatprep.mubr.bf16.mxu0 %v515
    %627 = vmatmul.mubr.bf16.gmra.mrb[0].mxu0 %v367
    %v628 = vpop.f32.mrb[0].mxu0
    %v629 = vadd.f32 %v407, %v628
    %v630 = vpop.f32.mrb[0].mxu0
    %v631 = vadd.f32 %v411, %v630
    %v632 = vpop.f32.mrb[0].mxu0
    %v633 = vadd.f32 %v407, %v632
    %v634 = vpop.f32.mrb[0].mxu0
    %v635 = vadd.f32 %v411, %v634
    %636 = vmatprep.mubr.bf16.mxu0 %v517
    %637 = vmatmul.mubr.bf16.gmra.mrb[0].mxu0 %v370
    %v638 = vpop.f32.mrb[0].mxu0
    %v639 = vadd.f32 %v407, %v638
    %v640 = vpop.f32.mrb[0].mxu0
    %v641 = vadd.f32 %v411, %v640
    %v642 = vpop.f32.mrb[0].mxu0
    %v643 = vadd.f32 %v407, %v642
    %v644 = vpop.f32.mrb[0].mxu0
    %v645 = vadd.f32 %v411, %v644
    %646 = vmatprep.mubr.bf16.mxu0 %v519
    %647 = vmatmul.mubr.bf16.gmra.mrb[0].mxu0 %v373
    %v648 = vpop.f32.mrb[0].mxu0
    %v649 = vadd.f32 %v407, %v648
    %v650 = vpop.f32.mrb[0].mxu0
    %v651 = vadd.f32 %v411, %v650
    %v652 = vpop.f32.mrb[0].mxu0
    %v653 = vadd.f32 %v407, %v652
    %v654 = vpop.f32.mrb[0].mxu0
    %v655 = vadd.f32 %v411, %v654
    %656 = vmatprep.mubr.bf16.mxu0 %v521
    %657 = vmatmul.mubr.bf16.gmra.mrb[0].mxu0 %v376
    %v658 = vpop.f32.mrb[0].mxu0
    %v659 = vadd.f32 %v407, %v658
    %v660 = vpop.f32.mrb[0].mxu0
    %v661 = vadd.f32 %v411, %v660
    %v662 = vpop.f32.mrb[0].mxu0
    %v663 = vadd.f32 %v407, %v662
    %v664 = vpop.f32.mrb[0].mxu0
    %v665 = vadd.f32 %v411, %v664
    %666 = vmatprep.mubr.bf16.mxu0 %v523
    %667 = vmatmul.mubr.bf16.gmra.mrb[0].mxu0 %v379
    %v668 = vpop.f32.mrb[0].mxu0
    %v669 = vadd.f32 %v407, %v668
    %v670 = vpop.f32.mrb[0].mxu0
    %v671 = vadd.f32 %v411, %v670
    %v672 = vpop.f32.mrb[0].mxu0
    %v673 = vadd.f32 %v407, %v672
    %v674 = vpop.f32.mrb[0].mxu0
    %v675 = vadd.f32 %v411, %v674
    %676 = vmatprep.mubr.bf16.mxu0 %v525
    %677 = vmatmul.mubr.bf16.gmra.mrb[0].mxu0 %v382
    %v678 = vpop.f32.mrb[0].mxu0
    %v679 = vadd.f32 %v407, %v678
    %v680 = vpop.f32.mrb[0].mxu0
    %v681 = vadd.f32 %v411, %v680
    %v682 = vpop.f32.mrb[0].mxu0
    %v683 = vadd.f32 %v407, %v682
    %v684 = vpop.f32.mrb[0].mxu0
    %v685 = vadd.f32 %v411, %v684
    %686 = vdwg.mxu0
    %v687 = vmax.f32 %v569, 0.0
    %v688 = vmax.f32 %v571, 0.0
    %v689 = vmax.f32 %v573, 0.0
    %v690 = vmax.f32 %v575, 0.0
    %v691 = vmax.f32 %v579, 0.0
    %v692 = vmax.f32 %v581, 0.0
    %v693 = vmax.f32 %v583, 0.0
    %v694 = vmax.f32 %v585, 0.0
    %v695 = vmax.f32 %v589, 0.0
    %v696 = vmax.f32 %v591, 0.0
    %v697 = vmax.f32 %v593, 0.0
    %v698 = vmax.f32 %v595, 0.0
    %v699 = vmax.f32 %v599, 0.0
    %v700 = vmax.f32 %v601, 0.0
    %v701 = vmax.f32 %v603, 0.0
    %v702 = vmax.f32 %v605, 0.0
    %v703 = vmax.f32 %v609, 0.0
    %v704 = vmax.f32 %v611, 0.0
    %v705 = vmax.f32 %v613, 0.0
    %v706 = vmax.f32 %v615, 0.0
    %v707 = vmax.f32 %v619, 0.0
    %v708 = vmax.f32 %v621, 0.0
    %v709 = vmax.f32 %v623, 0.0
    %v710 = vmax.f32 %v625, 0.0
    %v711 = vmax.f32 %v629, 0.0
    %v712 = vmax.f32 %v631, 0.0
    %v713 = vmax.f32 %v633, 0.0
    %v714 = vmax.f32 %v635, 0.0
    %v715 = vmax.f32 %v639, 0.0
    %v716 = vmax.f32 %v641, 0.0
    %v717 = vmax.f32 %v643, 0.0
    %v718 = vmax.f32 %v645, 0.0
    %v719 = vmax.f32 %v649, 0.0
    %v720 = vmax.f32 %v651, 0.0
    %v721 = vmax.f32 %v653, 0.0
    %v722 = vmax.f32 %v655, 0.0
    %v723 = vmax.f32 %v659, 0.0
    %v724 = vmax.f32 %v661, 0.0
    %v725 = vmax.f32 %v663, 0.0
    %v726 = vmax.f32 %v665, 0.0
    %v727 = vmax.f32 %v669, 0.0
    %v728 = vmax.f32 %v671, 0.0
    %v729 = vmax.f32 %v673, 0.0
    %v730 = vmax.f32 %v675, 0.0
    %v731 = vmax.f32 %v679, 0.0
    %v732 = vmax.f32 %v681, 0.0
    %v733 = vmax.f32 %v683, 0.0
    %v734 = vmax.f32 %v685, 0.0
    %v735 = vmax.f32 %v687, %v689
    %v736 = vmax.f32 %v688, %v690
    %v737 = vmax.f32 %v691, %v693
    %v738 = vmax.f32 %v692, %v694
    %v739 = vmax.f32 %v695, %v697
    %v740 = vmax.f32 %v696, %v698
    %v741 = vmax.f32 %v699, %v701
    %v742 = vmax.f32 %v700, %v702
    %v743 = vmax.f32 %v703, %v705
    %v744 = vmax.f32 %v704, %v706
    %v745 = vmax.f32 %v707, %v709
    %v746 = vmax.f32 %v708, %v710
    %v747 = vmax.f32 %v711, %v713
    %v748 = vmax.f32 %v712, %v714
    %v749 = vmax.f32 %v715, %v717
    %v750 = vmax.f32 %v716, %v718
    %v751 = vmax.f32 %v719, %v721
    %v752 = vmax.f32 %v720, %v722
    %v753 = vmax.f32 %v723, %v725
    %v754 = vmax.f32 %v724, %v726
    %v755 = vmax.f32 %v727, %v729
    %v756 = vmax.f32 %v728, %v730
    %v757 = vmax.f32 %v731, %v733
    %v758 = vmax.f32 %v732, %v734
    %v759 = vmax.f32 %v735, %v736
    %v760 = vmax.f32 %v737, %v738
    %v761 = vmax.f32 %v739, %v740
    %v762 = vmax.f32 %v741, %v742
    %v763 = vmax.f32 %v743, %v744
    %v764 = vmax.f32 %v745, %v746
    %v765 = vmax.f32 %v747, %v748
    %v766 = vmax.f32 %v749, %v750
    %v767 = vmax.f32 %v751, %v752
    %v768 = vmax.f32 %v753, %v754
    %v769 = vmax.f32 %v755, %v756
    %v770 = vmax.f32 %v757, %v758
    %v771 = vpack.c.bf16 %v760, %v759
    %v772 = vpack.c.bf16 %v762, %v761
    %v773 = vpack.c.bf16 %v764, %v763
    %v774 = vpack.c.bf16 %v766, %v765
    %v775 = vpack.c.bf16 %v768, %v767
    %v776 = vpack.c.bf16 %v770, %v769
    %vm782 = vcmask 1043456
    %v783 = vrot.slane %v771, 4
    %v784 = vrot.slane %v772, 4
    %v785 = vsel %vm782, %v783, %v784
    %v786 = vrot.slane %v773, 4
    %v787 = vsel %vm782, %v784, %v786
    %v788 = vrot.slane %v774, 4
    %v789 = vsel %vm782, %v786, %v788
    %v790 = vrot.slane %v775, 4
    %v791 = vsel %vm782, %v788, %v790
    %v797 = vrot.slane %v776, 4
    %v798 = vsel %vm782, %v790, %v797
    %v800 = vld [vmem:[%s3] sm:$0xff]
    %v801 = vld [vmem:[%s3 + $0x8] sm:$0xff]
    %v802 = vld [vmem:[%s3 + $0x10] sm:$0xff]
    %v803 = vld [vmem:[%s3 + $0x18] sm:$0xff]
    %v804 = vld [vmem:[%s3 + $0x20] sm:$0xff]
    %v805 = vld [vmem:[%s3 + $0x28] sm:$0xff]
    %v806 = vld [vmem:[%s3 + $0x30] sm:$0xff]
    %v807 = vld [vmem:[%s3 + $0x38] sm:$0xff]
    %v808 = vld [vmem:[%s3 + $0x40] sm:$0xff]
    %v809 = vld [vmem:[%s3 + $0x48] sm:$0xff]
    %v810 = vld [vmem:[%s3 + $0x50] sm:$0xff]
    %v811 = vld [vmem:[%s3 + $0x58] sm:$0xff]
    %v812 = vld [vmem:[%s3 + $0x60] sm:$0xff]
    %v813 = vld [vmem:[%s3 + $0x68] sm:$0xff]
    %v814 = vld [vmem:[%s3 + $0x70] sm:$0xff]
    %v815 = vld [vmem:[%s3 + $0x78] sm:$0xff]
    %v816 = vld [vmem:[%s3 + $0x80] sm:$0xff]
    %v817 = vld [vmem:[%s3 + $0x88] sm:$0xff]
    %v818 = vld [vmem:[%s3 + $0x90] sm:$0xff]
    %v819 = vld [vmem:[%s3 + $0x98] sm:$0xff]
    %v820 = vld [vmem:[%s3 + $0xa0] sm:$0xff]
    %v821 = vld [vmem:[%s3 + $0xa8] sm:$0xff]
    %v822 = vld [vmem:[%s3 + $0xb0] sm:$0xff]
    %v823 = vld [vmem:[%s3 + $0xb8] sm:$0xff]
    %v824 = vld [vmem:[%s3 + $0xc0] sm:$0xff]
    %v825 = vld [vmem:[%s3 + $0xc8] sm:$0xff]
    %v826 = vld [vmem:[%s3 + $0xd0] sm:$0xff]
    %v827 = vld [vmem:[%s3 + $0xd8] sm:$0xff]
    %v828 = vld [vmem:[%s3 + $0xe0] sm:$0xff]
    %v829 = vld [vmem:[%s3 + $0xe8] sm:$0xff]
    %v830 = vld [vmem:[%s3 + $0xf0] sm:$0xff]
    %v831 = vld [vmem:[%s3 + $0xf8] sm:$0xff]
    %v832 = vld [vmem:[%s3 + $0x100] sm:$0xff]
    %v833 = vld [vmem:[%s3 + $0x108] sm:$0xff]
    %v834 = vld [vmem:[%s3 + $0x110] sm:$0xff]
    %v835 = vld [vmem:[%s3 + $0x118] sm:$0xff]
    %v836 = vld [vmem:[%s3 + $0x120] sm:$0xff]
    %v837 = vld [vmem:[%s3 + $0x128] sm:$0xff]
    %v838 = vld [vmem:[%s3 + $0x130] sm:$0xff]
    %v839 = vld [vmem:[%s3 + $0x138] sm:$0xff]
    %v840 = vld [vmem:[%s3 + $0x140] sm:$0xff]
    %v841 = vld [vmem:[%s3 + $0x148] sm:$0xff]
    %v842 = vld [vmem:[%s3 + $0x150] sm:$0xff]
    %v843 = vld [vmem:[%s3 + $0x158] sm:$0xff]
    %v844 = vld [vmem:[%s3 + $0x160] sm:$0xff]
    %v845 = vld [vmem:[%s3 + $0x168] sm:$0xff]
    %v846 = vld [vmem:[%s3 + $0x170] sm:$0xff]
    %v847 = vld [vmem:[%s3 + $0x178] sm:$0xff]
    %v848 = vld [vmem:[%s3 + $0x180] sm:$0xff]
    %v849 = vld [vmem:[%s3 + $0x188] sm:$0xff]
    %v850 = vld [vmem:[%s3 + $0x190] sm:$0xff]
    %v851 = vld [vmem:[%s3 + $0x198] sm:$0xff]
    %v852 = vld [vmem:[%s3 + $0x1a0] sm:$0xff]
    %v853 = vld [vmem:[%s3 + $0x1a8] sm:$0xff]
    %v854 = vld [vmem:[%s3 + $0x1b0] sm:$0xff]
    %v855 = vld [vmem:[%s3 + $0x1b8] sm:$0xff]
    %v856 = vld [vmem:[%s3 + $0x1c0] sm:$0xff]
    %v857 = vld [vmem:[%s3 + $0x1c8] sm:$0xff]
    %v858 = vld [vmem:[%s3 + $0x1d0] sm:$0xff]
    %v859 = vld [vmem:[%s3 + $0x1d8] sm:$0xff]
    %v860 = vld [vmem:[%s3 + $0x1e0] sm:$0xff]
    %v861 = vld [vmem:[%s3 + $0x1e8] sm:$0xff]
    %v862 = vld [vmem:[%s3 + $0x1f0] sm:$0xff]
    %v863 = vld [vmem:[%s3 + $0x1f8] sm:$0xff]
    %v864 = vld [vmem:[%s3 + $0x200] sm:$0xff]
    %v865 = vld [vmem:[%s3 + $0x208] sm:$0xff]
    %v866 = vld [vmem:[%s3 + $0x210] sm:$0xff]
    %v867 = vld [vmem:[%s3 + $0x218] sm:$0xff]
    %v868 = vld [vmem:[%s3 + $0x220] sm:$0xff]
    %v869 = vld [vmem:[%s3 + $0x228] sm:$0xff]
    %v870 = vld [vmem:[%s3 + $0x230] sm:$0xff]
    %v871 = vld [vmem:[%s3 + $0x238] sm:$0xff]
    %v872 = vld [vmem:[%s3 + $0x240] sm:$0xff]
    %v873 = vld [vmem:[%s3 + $0x248] sm:$0xff]
    %v874 = vld [vmem:[%s3 + $0x250] sm:$0xff]
    %v875 = vld [vmem:[%s3 + $0x258] sm:$0xff]
    %v876 = vld [vmem:[%s3 + $0x260] sm:$0xff]
    %v877 = vld [vmem:[%s3 + $0x268] sm:$0xff]
    %v878 = vld [vmem:[%s3 + $0x270] sm:$0xff]
    %v879 = vld [vmem:[%s3 + $0x278] sm:$0xff]
    %v880 = vld [vmem:[%s4] sm:$0x3]
    %v882 = vlaneseq
    %v883 = vshrl.u32 %v882, 7
    %v884 = vsub.s32 0, %v883
    %v885 = vrot.slane %v880, %v884
    %v886 = vlaneseq
    %v887 = vshrl.u32 %v886, 7
    %v888 = vsub.s32 1, %v887
    %v889 = vrot.slane %v880, %v888
    %v972 = vunpack.c.l.b16 %v800
    %v973 = vunpack.c.h.b16 %v800
    %v974 = vunpack.c.l.b16 %v801
    %v975 = vunpack.c.h.b16 %v801
    %v976 = vunpack.c.l.b16 %v802
    %v977 = vunpack.c.h.b16 %v802
    %v978 = vunpack.c.l.b16 %v803
    %v979 = vunpack.c.h.b16 %v803
    %v980 = vunpack.c.l.b16 %v804
    %v981 = vunpack.c.h.b16 %v804
    %v982 = vunpack.c.l.b16 %v805
    %v983 = vunpack.c.h.b16 %v805
    %v984 = vunpack.c.l.b16 %v806
    %v985 = vunpack.c.h.b16 %v806
    %v986 = vunpack.c.l.b16 %v807
    %v987 = vunpack.c.h.b16 %v807
    %v988 = vunpack.c.l.b16 %v808
    %v989 = vunpack.c.h.b16 %v808
    %v990 = vunpack.c.l.b16 %v809
    %v991 = vunpack.c.h.b16 %v809
    %v992 = vunpack.c.l.b16 %v810
    %v993 = vunpack.c.h.b16 %v810
    %v994 = vunpack.c.l.b16 %v811
    %v995 = vunpack.c.h.b16 %v811
    %v996 = vunpack.c.l.b16 %v812
    %v997 = vunpack.c.h.b16 %v812
    %v998 = vunpack.c.l.b16 %v813
    %v999 = vunpack.c.h.b16 %v813
    %v1000 = vunpack.c.l.b16 %v814
    %v1001 = vunpack.c.h.b16 %v814
    %v1002 = vunpack.c.l.b16 %v815
    %v1003 = vunpack.c.h.b16 %v815
    %v1004 = vunpack.c.l.b16 %v816
    %v1005 = vunpack.c.h.b16 %v816
    %v1006 = vunpack.c.l.b16 %v817
    %v1007 = vunpack.c.h.b16 %v817
    %v1008 = vunpack.c.l.b16 %v818
    %v1009 = vunpack.c.h.b16 %v818
    %v1010 = vunpack.c.l.b16 %v819
    %v1011 = vunpack.c.h.b16 %v819
    %v1012 = vunpack.c.l.b16 %v820
    %v1013 = vunpack.c.h.b16 %v820
    %v1014 = vunpack.c.l.b16 %v821
    %v1015 = vunpack.c.h.b16 %v821
    %v1016 = vunpack.c.l.b16 %v822
    %v1017 = vunpack.c.h.b16 %v822
    %v1018 = vunpack.c.l.b16 %v823
    %v1019 = vunpack.c.h.b16 %v823
    %v1020 = vunpack.c.l.b16 %v824
    %v1021 = vunpack.c.h.b16 %v824
    %v1022 = vunpack.c.l.b16 %v825
    %v1023 = vunpack.c.h.b16 %v825
    %v1024 = vunpack.c.l.b16 %v826
    %v1025 = vunpack.c.h.b16 %v826
    %v1026 = vunpack.c.l.b16 %v827
    %v1027 = vunpack.c.h.b16 %v827
    %v1028 = vunpack.c.l.b16 %v828
    %v1029 = vunpack.c.h.b16 %v828
    %v1030 = vunpack.c.l.b16 %v829
    %v1031 = vunpack.c.h.b16 %v829
    %v1032 = vunpack.c.l.b16 %v830
    %v1033 = vunpack.c.h.b16 %v830
    %v1034 = vunpack.c.l.b16 %v831
    %v1035 = vunpack.c.h.b16 %v831
    %v1036 = vunpack.c.l.b16 %v832
    %v1037 = vunpack.c.h.b16 %v832
    %v1038 = vunpack.c.l.b16 %v833
    %v1039 = vunpack.c.h.b16 %v833
    %v1040 = vunpack.c.l.b16 %v834
    %v1041 = vunpack.c.h.b16 %v834
    %v1042 = vunpack.c.l.b16 %v835
    %v1043 = vunpack.c.h.b16 %v835
    %v1044 = vunpack.c.l.b16 %v836
    %v1045 = vunpack.c.h.b16 %v836
    %v1046 = vunpack.c.l.b16 %v837
    %v1047 = vunpack.c.h.b16 %v837
    %v1048 = vunpack.c.l.b16 %v838
    %v1049 = vunpack.c.h.b16 %v838
    %v1050 = vunpack.c.l.b16 %v839
    %v1051 = vunpack.c.h.b16 %v839
    %v1052 = vunpack.c.l.b16 %v840
    %v1053 = vunpack.c.h.b16 %v840
    %v1054 = vunpack.c.l.b16 %v841
    %v1055 = vunpack.c.h.b16 %v841
    %v1056 = vunpack.c.l.b16 %v842
    %v1057 = vunpack.c.h.b16 %v842
    %v1058 = vunpack.c.l.b16 %v843
    %v1059 = vunpack.c.h.b16 %v843
    %v1060 = vunpack.c.l.b16 %v844
    %v1061 = vunpack.c.h.b16 %v844
    %v1062 = vunpack.c.l.b16 %v845
    %v1063 = vunpack.c.h.b16 %v845
    %v1064 = vunpack.c.l.b16 %v846
    %v1065 = vunpack.c.h.b16 %v846
    %v1066 = vunpack.c.l.b16 %v847
    %v1067 = vunpack.c.h.b16 %v847
    %v1068 = vunpack.c.l.b16 %v848
    %v1069 = vunpack.c.h.b16 %v848
    %v1070 = vunpack.c.l.b16 %v849
    %v1071 = vunpack.c.h.b16 %v849
    %v1072 = vunpack.c.l.b16 %v850
    %v1073 = vunpack.c.h.b16 %v850
    %v1074 = vunpack.c.l.b16 %v851
    %v1075 = vunpack.c.h.b16 %v851
    %v1076 = vunpack.c.l.b16 %v852
    %v1077 = vunpack.c.h.b16 %v852
    %v1078 = vunpack.c.l.b16 %v853
    %v1079 = vunpack.c.h.b16 %v853
    %v1080 = vunpack.c.l.b16 %v854
    %v1081 = vunpack.c.h.b16 %v854
    %v1082 = vunpack.c.l.b16 %v855
    %v1083 = vunpack.c.h.b16 %v855
    %v1084 = vunpack.c.l.b16 %v856
    %v1085 = vunpack.c.h.b16 %v856
    %v1086 = vunpack.c.l.b16 %v857
    %v1087 = vunpack.c.h.b16 %v857
    %v1088 = vunpack.c.l.b16 %v858
    %v1089 = vunpack.c.h.b16 %v858
    %v1090 = vunpack.c.l.b16 %v859
    %v1091 = vunpack.c.h.b16 %v859
    %v1092 = vunpack.c.l.b16 %v860
    %v1093 = vunpack.c.h.b16 %v860
    %v1094 = vunpack.c.l.b16 %v861
    %v1095 = vunpack.c.h.b16 %v861
    %v1096 = vunpack.c.l.b16 %v862
    %v1097 = vunpack.c.h.b16 %v862
    %v1098 = vunpack.c.l.b16 %v863
    %v1099 = vunpack.c.h.b16 %v863
    %v1100 = vunpack.c.l.b16 %v864
    %v1101 = vunpack.c.h.b16 %v864
    %v1102 = vunpack.c.l.b16 %v865
    %v1103 = vunpack.c.h.b16 %v865
    %v1104 = vunpack.c.l.b16 %v866
    %v1105 = vunpack.c.h.b16 %v866
    %v1106 = vunpack.c.l.b16 %v867
    %v1107 = vunpack.c.h.b16 %v867
    %v1108 = vunpack.c.l.b16 %v868
    %v1109 = vunpack.c.h.b16 %v868
    %v1110 = vunpack.c.l.b16 %v869
    %v1111 = vunpack.c.h.b16 %v869
    %v1112 = vunpack.c.l.b16 %v870
    %v1113 = vunpack.c.h.b16 %v870
    %v1114 = vunpack.c.l.b16 %v871
    %v1115 = vunpack.c.h.b16 %v871
    %v1116 = vunpack.c.l.b16 %v872
    %v1117 = vunpack.c.h.b16 %v872
    %v1118 = vunpack.c.l.b16 %v873
    %v1119 = vunpack.c.h.b16 %v873
    %v1120 = vunpack.c.l.b16 %v874
    %v1121 = vunpack.c.h.b16 %v874
    %v1122 = vunpack.c.l.b16 %v875
    %v1123 = vunpack.c.h.b16 %v875
    %v1124 = vunpack.c.l.b16 %v876
    %v1125 = vunpack.c.h.b16 %v876
    %v1126 = vunpack.c.l.b16 %v877
    %v1127 = vunpack.c.h.b16 %v877
    %v1128 = vunpack.c.l.b16 %v878
    %v1129 = vunpack.c.h.b16 %v878
    %v1130 = vunpack.c.l.b16 %v879
    %v1131 = vunpack.c.h.b16 %v879
    %v1132 = vpack.c.b16 %v974, %v972
    %v1133 = vpack.c.b16 %v975, %v973
    %v1134 = vpack.c.b16 %v978, %v976
    %v1135 = vpack.c.b16 %v979, %v977
    %v1136 = vpack.c.b16 %v982, %v980
    %v1137 = vpack.c.b16 %v983, %v981
    %v1138 = vpack.c.b16 %v986, %v984
    %v1139 = vpack.c.b16 %v987, %v985
    %v1140 = vpack.c.b16 %v990, %v988
    %v1141 = vpack.c.b16 %v991, %v989
    %v1142 = vpack.c.b16 %v994, %v992
    %v1143 = vpack.c.b16 %v995, %v993
    %v1144 = vpack.c.b16 %v998, %v996
    %v1145 = vpack.c.b16 %v999, %v997
    %v1146 = vpack.c.b16 %v1002, %v1000
    %v1147 = vpack.c.b16 %v1003, %v1001
    %v1148 = vpack.c.b16 %v1006, %v1004
    %v1149 = vpack.c.b16 %v1007, %v1005
    %v1150 = vpack.c.b16 %v1010, %v1008
    %v1151 = vpack.c.b16 %v1011, %v1009
    %v1152 = vpack.c.b16 %v1014, %v1012
    %v1153 = vpack.c.b16 %v1015, %v1013
    %v1154 = vpack.c.b16 %v1018, %v1016
    %v1155 = vpack.c.b16 %v1019, %v1017
    %v1156 = vpack.c.b16 %v1022, %v1020
    %v1157 = vpack.c.b16 %v1023, %v1021
    %v1158 = vpack.c.b16 %v1026, %v1024
    %v1159 = vpack.c.b16 %v1027, %v1025
    %v1160 = vpack.c.b16 %v1030, %v1028
    %v1161 = vpack.c.b16 %v1031, %v1029
    %v1162 = vpack.c.b16 %v1034, %v1032
    %v1163 = vpack.c.b16 %v1035, %v1033
    %v1164 = vpack.c.b16 %v1038, %v1036
    %v1165 = vpack.c.b16 %v1039, %v1037
    %v1166 = vpack.c.b16 %v1042, %v1040
    %v1167 = vpack.c.b16 %v1043, %v1041
    %v1168 = vpack.c.b16 %v1046, %v1044
    %v1169 = vpack.c.b16 %v1047, %v1045
    %v1170 = vpack.c.b16 %v1050, %v1048
    %v1171 = vpack.c.b16 %v1051, %v1049
    %v1172 = vpack.c.b16 %v1054, %v1052
    %v1173 = vpack.c.b16 %v1055, %v1053
    %v1174 = vpack.c.b16 %v1058, %v1056
    %v1175 = vpack.c.b16 %v1059, %v1057
    %v1176 = vpack.c.b16 %v1062, %v1060
    %v1177 = vpack.c.b16 %v1063, %v1061
    %v1178 = vpack.c.b16 %v1066, %v1064
    %v1179 = vpack.c.b16 %v1067, %v1065
    %v1180 = vpack.c.b16 %v1070, %v1068
    %v1181 = vpack.c.b16 %v1071, %v1069
    %v1182 = vpack.c.b16 %v1074, %v1072
    %v1183 = vpack.c.b16 %v1075, %v1073
    %v1184 = vpack.c.b16 %v1078, %v1076
    %v1185 = vpack.c.b16 %v1079, %v1077
    %v1186 = vpack.c.b16 %v1082, %v1080
    %v1187 = vpack.c.b16 %v1083, %v1081
    %v1188 = vpack.c.b16 %v1086, %v1084
    %v1189 = vpack.c.b16 %v1087, %v1085
    %v1190 = vpack.c.b16 %v1090, %v1088
    %v1191 = vpack.c.b16 %v1091, %v1089
    %v1192 = vpack.c.b16 %v1094, %v1092
    %v1193 = vpack.c.b16 %v1095, %v1093
    %v1194 = vpack.c.b16 %v1098, %v1096
    %v1195 = vpack.c.b16 %v1099, %v1097
    %v1196 = vpack.c.b16 %v1102, %v1100
    %v1197 = vpack.c.b16 %v1103, %v1101
    %v1198 = vpack.c.b16 %v1106, %v1104
    %v1199 = vpack.c.b16 %v1107, %v1105
    %v1200 = vpack.c.b16 %v1110, %v1108
    %v1201 = vpack.c.b16 %v1111, %v1109
    %v1202 = vpack.c.b16 %v1114, %v1112
    %v1203 = vpack.c.b16 %v1115, %v1113
    %v1204 = vpack.c.b16 %v1118, %v1116
    %v1205 = vpack.c.b16 %v1119, %v1117
    %v1206 = vpack.c.b16 %v1122, %v1120
    %v1207 = vpack.c.b16 %v1123, %v1121
    %v1208 = vpack.c.b16 %v1126, %v1124
    %v1209 = vpack.c.b16 %v1127, %v1125
    %v1210 = vpack.c.b16 %v1130, %v1128
    %v1211 = vpack.c.b16 %v1131, %v1129
    %1292 = vmatprep.subr.bf16.mxu0 %v1133
    %1293 = vmatpush1.bf16.msra.mxu0 %v1132
    %1294 = vmatprep.subr.bf16.mxu0 %v1135
    %1295 = vmatpush1.bf16.msra.mxu0 %v1134
    %1296 = vmatprep.subr.bf16.mxu0 %v1137
    %1297 = vmatpush1.bf16.msra.mxu0 %v1136
    %1298 = vmatprep.subr.bf16.mxu0 %v1139
    %1299 = vmatpush1.bf16.msra.mxu0 %v1138
    %1300 = vmatprep.subr.bf16.mxu0 %v1141
    %1301 = vmatpush1.bf16.msra.mxu0 %v1140
    %1302 = vmatprep.subr.bf16.mxu0 %v1143
    %1303 = vmatpush1.bf16.msra.mxu0 %v1142
    %1304 = vmatprep.subr.bf16.mxu0 %v1145
    %1305 = vmatpush1.bf16.msra.mxu0 %v1144
    %1306 = vmatprep.subr.bf16.mxu0 %v1147
    %1307 = vmatpush1.bf16.msra.mxu0 %v1146
    %1308 = vmatprep.subr.bf16.mxu0 %v1149
    %1309 = vmatpush1.bf16.msra.mxu0 %v1148
    %1310 = vmatprep.subr.bf16.mxu0 %v1151
    %1311 = vmatpush1.bf16.msra.mxu0 %v1150
    %1312 = vmatprep.subr.bf16.mxu0 %v1153
    %1313 = vmatpush1.bf16.msra.mxu0 %v1152
    %1314 = vmatprep.subr.bf16.mxu0 %v1155
    %1315 = vmatpush1.bf16.msra.mxu0 %v1154
    %1316 = vmatprep.subr.bf16.mxu0 %v1157
    %1317 = vmatpush1.bf16.msra.mxu0 %v1156
    %1318 = vmatprep.subr.bf16.mxu0 %v1159
    %1319 = vmatpush1.bf16.msra.mxu0 %v1158
    %1320 = vmatprep.subr.bf16.mxu0 %v1161
    %1321 = vmatpush1.bf16.msra.mxu0 %v1160
    %1322 = vmatprep.subr.bf16.mxu0 %v1163
    %1323 = vmatpush1.bf16.msra.mxu0 %v1162
    %1324 = vmatprep.mubr.bf16.mxu0 %v785
    %1325 = vmatmul.mubr.bf16.gmra.mrb[0].mxu0 %v771
    %v1326 = vpop.f32.mrb[0].mxu0
    %v1327 = vadd.f32 %v885, %v1326
    %v1328 = vpop.f32.mrb[0].mxu0
    %v1329 = vadd.f32 %v889, %v1328
    %v1330 = vpop.f32.mrb[0].mxu0
    %v1331 = vadd.f32 %v885, %v1330
    %v1332 = vpop.f32.mrb[0].mxu0
    %v1333 = vadd.f32 %v889, %v1332
    %1334 = vmatprep.mubr.bf16.mxu0 %v787
    %1335 = vmatmul.mubr.bf16.gmra.mrb[0].mxu0 %v772
    %v1336 = vpop.f32.mrb[0].mxu0
    %v1337 = vadd.f32 %v885, %v1336
    %v1338 = vpop.f32.mrb[0].mxu0
    %v1339 = vadd.f32 %v889, %v1338
    %v1340 = vpop.f32.mrb[0].mxu0
    %v1341 = vadd.f32 %v885, %v1340
    %v1342 = vpop.f32.mrb[0].mxu0
    %v1343 = vadd.f32 %v889, %v1342
    %1344 = vmatprep.mubr.bf16.mxu0 %v789
    %1345 = vmatmul.mubr.bf16.gmra.mrb[0].mxu0 %v773
    %v1346 = vpop.f32.mrb[0].mxu0
    %v1347 = vadd.f32 %v885, %v1346
    %v1348 = vpop.f32.mrb[0].mxu0
    %v1349 = vadd.f32 %v889, %v1348
    %v1350 = vpop.f32.mrb[0].mxu0
    %v1351 = vadd.f32 %v885, %v1350
    %v1352 = vpop.f32.mrb[0].mxu0
    %v1353 = vadd.f32 %v889, %v1352
    %1354 = vmatprep.mubr.bf16.mxu0 %v791
    %1355 = vmatmul.mubr.bf16.gmra.mrb[0].mxu0 %v774
    %v1356 = vpop.f32.mrb[0].mxu0
    %v1357 = vadd.f32 %v885, %v1356
    %v1358 = vpop.f32.mrb[0].mxu0
    %v1359 = vadd.f32 %v889, %v1358
    %v1360 = vpop.f32.mrb[0].mxu0
    %v1361 = vadd.f32 %v885, %v1360
    %v1362 = vpop.f32.mrb[0].mxu0
    %v1363 = vadd.f32 %v889, %v1362
    %1364 = vdwg.mxu0
    %1365 = vmatprep.subr.bf16.mxu0 %v1165
    %1366 = vmatpush1.bf16.msra.mxu0 %v1164
    %1367 = vmatprep.subr.bf16.mxu0 %v1167
    %1368 = vmatpush1.bf16.msra.mxu0 %v1166
    %1369 = vmatprep.subr.bf16.mxu0 %v1169
    %1370 = vmatpush1.bf16.msra.mxu0 %v1168
    %1371 = vmatprep.subr.bf16.mxu0 %v1171
    %1372 = vmatpush1.bf16.msra.mxu0 %v1170
    %1373 = vmatprep.subr.bf16.mxu0 %v1173
    %1374 = vmatpush1.bf16.msra.mxu0 %v1172
    %1375 = vmatprep.subr.bf16.mxu0 %v1175
    %1376 = vmatpush1.bf16.msra.mxu0 %v1174
    %1377 = vmatprep.subr.bf16.mxu0 %v1177
    %1378 = vmatpush1.bf16.msra.mxu0 %v1176
    %1379 = vmatprep.subr.bf16.mxu0 %v1179
    %1380 = vmatpush1.bf16.msra.mxu0 %v1178
    %1381 = vmatprep.subr.bf16.mxu0 %v1181
    %1382 = vmatpush1.bf16.msra.mxu0 %v1180
    %1383 = vmatprep.subr.bf16.mxu0 %v1183
    %1384 = vmatpush1.bf16.msra.mxu0 %v1182
    %1385 = vmatprep.subr.bf16.mxu0 %v1185
    %1386 = vmatpush1.bf16.msra.mxu0 %v1184
    %1387 = vmatprep.subr.bf16.mxu0 %v1187
    %1388 = vmatpush1.bf16.msra.mxu0 %v1186
    %1389 = vmatprep.subr.bf16.mxu0 %v1189
    %1390 = vmatpush1.bf16.msra.mxu0 %v1188
    %1391 = vmatprep.subr.bf16.mxu0 %v1191
    %1392 = vmatpush1.bf16.msra.mxu0 %v1190
    %1393 = vmatprep.subr.bf16.mxu0 %v1193
    %1394 = vmatpush1.bf16.msra.mxu0 %v1192
    %1395 = vmatprep.subr.bf16.mxu0 %v1195
    %1396 = vmatpush1.bf16.msra.mxu0 %v1194
    %1397 = vmatprep.mubr.bf16.mxu0 %v787
    %1398 = vmatmul.mubr.bf16.gmra.mrb[0].mxu0 %v772
    %v1399 = vpop.f32.mrb[0].mxu0
    %v1400 = vadd.f32 %v1327, %v1399
    %v1401 = vpop.f32.mrb[0].mxu0
    %v1402 = vadd.f32 %v1329, %v1401
    %v1403 = vpop.f32.mrb[0].mxu0
    %v1404 = vadd.f32 %v1331, %v1403
    %v1405 = vpop.f32.mrb[0].mxu0
    %v1406 = vadd.f32 %v1333, %v1405
    %1407 = vmatprep.mubr.bf16.mxu0 %v789
    %1408 = vmatmul.mubr.bf16.gmra.mrb[0].mxu0 %v773
    %v1409 = vpop.f32.mrb[0].mxu0
    %v1410 = vadd.f32 %v1337, %v1409
    %v1411 = vpop.f32.mrb[0].mxu0
    %v1412 = vadd.f32 %v1339, %v1411
    %v1413 = vpop.f32.mrb[0].mxu0
    %v1414 = vadd.f32 %v1341, %v1413
    %v1415 = vpop.f32.mrb[0].mxu0
    %v1416 = vadd.f32 %v1343, %v1415
    %1417 = vmatprep.mubr.bf16.mxu0 %v791
    %1418 = vmatmul.mubr.bf16.gmra.mrb[0].mxu0 %v774
    %v1419 = vpop.f32.mrb[0].mxu0
    %v1420 = vadd.f32 %v1347, %v1419
    %v1421 = vpop.f32.mrb[0].mxu0
    %v1422 = vadd.f32 %v1349, %v1421
    %v1423 = vpop.f32.mrb[0].mxu0
    %v1424 = vadd.f32 %v1351, %v1423
    %v1425 = vpop.f32.mrb[0].mxu0
    %v1426 = vadd.f32 %v1353, %v1425
    %1427 = vmatprep.mubr.bf16.mxu0 %v798
    %1428 = vmatmul.mubr.bf16.gmra.mrb[0].mxu0 %v775
    %v1429 = vpop.f32.mrb[0].mxu0
    %v1430 = vadd.f32 %v1357, %v1429
    %v1431 = vpop.f32.mrb[0].mxu0
    %v1432 = vadd.f32 %v1359, %v1431
    %v1433 = vpop.f32.mrb[0].mxu0
    %v1434 = vadd.f32 %v1361, %v1433
    %v1435 = vpop.f32.mrb[0].mxu0
    %v1436 = vadd.f32 %v1363, %v1435
    %1437 = vdwg.mxu0
    %1438 = vmatprep.subr.bf16.mxu0 %v1197
    %1439 = vmatpush1.bf16.msra.mxu0 %v1196
    %1440 = vmatprep.subr.bf16.mxu0 %v1199
    %1441 = vmatpush1.bf16.msra.mxu0 %v1198
    %1442 = vmatprep.subr.bf16.mxu0 %v1201
    %1443 = vmatpush1.bf16.msra.mxu0 %v1200
    %1444 = vmatprep.subr.bf16.mxu0 %v1203
    %1445 = vmatpush1.bf16.msra.mxu0 %v1202
    %1446 = vmatprep.subr.bf16.mxu0 %v1205
    %1447 = vmatpush1.bf16.msra.mxu0 %v1204
    %1448 = vmatprep.subr.bf16.mxu0 %v1207
    %1449 = vmatpush1.bf16.msra.mxu0 %v1206
    %1450 = vmatprep.subr.bf16.mxu0 %v1209
    %1451 = vmatpush1.bf16.msra.mxu0 %v1208
    %1452 = vmatprep.subr.bf16.mxu0 %v1211
    %1453 = vmatpush1.bf16.msra.mxu0 %v1210
    %1454 = vmatprep.subr.bf16.mxu0 0
    %1455 = vmatpush1.bf16.msra.mxu0 0
    %1456 = vmatprep.subr.bf16.mxu0 0
    %1457 = vmatpush1.bf16.msra.mxu0 0
    %1458 = vmatprep.subr.bf16.mxu0 0
    %1459 = vmatpush1.bf16.msra.mxu0 0
    %1460 = vmatprep.subr.bf16.mxu0 0
    %1461 = vmatpush1.bf16.msra.mxu0 0
    %1462 = vmatprep.subr.bf16.mxu0 0
    %1463 = vmatpush1.bf16.msra.mxu0 0
    %1464 = vmatprep.subr.bf16.mxu0 0
    %1465 = vmatpush1.bf16.msra.mxu0 0
    %1466 = vmatprep.subr.bf16.mxu0 0
    %1467 = vmatpush1.bf16.msra.mxu0 0
    %1468 = vmatprep.subr.bf16.mxu0 0
    %1469 = vmatpush1.bf16.msra.mxu0 0
    %1470 = vmatprep.mubr.bf16.mxu0 0
    %1471 = vmatmul.mubr.bf16.gmra.mrb[0].mxu0 %v773
    %v1472 = vpop.f32.mrb[0].mxu0
    %v1473 = vadd.f32 %v1400, %v1472
    %v1474 = vpop.f32.mrb[0].mxu0
    %v1475 = vadd.f32 %v1402, %v1474
    %v1476 = vpop.f32.mrb[0].mxu0
    %v1477 = vadd.f32 %v1404, %v1476
    %v1478 = vpop.f32.mrb[0].mxu0
    %v1479 = vadd.f32 %v1406, %v1478
    %1480 = vmatprep.mubr.bf16.mxu0 0
    %1481 = vmatmul.mubr.bf16.gmra.mrb[0].mxu0 %v774
    %v1482 = vpop.f32.mrb[0].mxu0
    %v1483 = vadd.f32 %v1410, %v1482
    %v1484 = vpop.f32.mrb[0].mxu0
    %v1485 = vadd.f32 %v1412, %v1484
    %v1486 = vpop.f32.mrb[0].mxu0
    %v1487 = vadd.f32 %v1414, %v1486
    %v1488 = vpop.f32.mrb[0].mxu0
    %v1489 = vadd.f32 %v1416, %v1488
    %1490 = vmatprep.mubr.bf16.mxu0 0
    %1491 = vmatmul.mubr.bf16.gmra.mrb[0].mxu0 %v775
    %v1492 = vpop.f32.mrb[0].mxu0
    %v1493 = vadd.f32 %v1420, %v1492
    %v1494 = vpop.f32.mrb[0].mxu0
    %v1495 = vadd.f32 %v1422, %v1494
    %v1496 = vpop.f32.mrb[0].mxu0
    %v1497 = vadd.f32 %v1424, %v1496
    %v1498 = vpop.f32.mrb[0].mxu0
    %v1499 = vadd.f32 %v1426, %v1498
    %1500 = vmatprep.mubr.bf16.mxu0 0
    %1501 = vmatmul.mubr.bf16.gmra.mrb[0].mxu0 %v776
    %v1502 = vpop.f32.mrb[0].mxu0
    %v1503 = vadd.f32 %v1430, %v1502
    %v1504 = vpop.f32.mrb[0].mxu0
    %v1505 = vadd.f32 %v1432, %v1504
    %v1506 = vpop.f32.mrb[0].mxu0
    %v1507 = vadd.f32 %v1434, %v1506
    %v1508 = vpop.f32.mrb[0].mxu0
    %v1509 = vadd.f32 %v1436, %v1508
    %1510 = vdwg.mxu0
    %v1511 = vmax.f32 %v1473, 0.0
    %v1512 = vmax.f32 %v1475, 0.0
    %v1513 = vmax.f32 %v1477, 0.0
    %v1514 = vmax.f32 %v1479, 0.0
    %v1515 = vmax.f32 %v1483, 0.0
    %v1516 = vmax.f32 %v1485, 0.0
    %v1517 = vmax.f32 %v1487, 0.0
    %v1518 = vmax.f32 %v1489, 0.0
    %v1519 = vmax.f32 %v1493, 0.0
    %v1520 = vmax.f32 %v1495, 0.0
    %v1521 = vmax.f32 %v1497, 0.0
    %v1522 = vmax.f32 %v1499, 0.0
    %v1523 = vmax.f32 %v1503, 0.0
    %v1524 = vmax.f32 %v1505, 0.0
    %v1525 = vmax.f32 %v1507, 0.0
    %v1526 = vmax.f32 %v1509, 0.0
    %v1527 = vmax.f32 %v1511, %v1513
    %v1528 = vmax.f32 %v1512, %v1514
    %v1529 = vmax.f32 %v1515, %v1517
    %v1530 = vmax.f32 %v1516, %v1518
    %v1531 = vmax.f32 %v1519, %v1521
    %v1532 = vmax.f32 %v1520, %v1522
    %v1533 = vmax.f32 %v1523, %v1525
    %v1534 = vmax.f32 %v1524, %v1526
    %v1535 = vmax.f32 %v1527, %v1528
    %v1536 = vmax.f32 %v1529, %v1530
    %v1537 = vmax.f32 %v1531, %v1532
    %v1538 = vmax.f32 %v1533, %v1534
    %v1539 = vpack.c.bf16 %v1536, %v1535
    %v1540 = vpack.c.bf16 %v1538, %v1537
    %v1542 = vrot.slane %v1539, 4
    %v1545 = vrot.slane %v1540, 4
    %v1547 = vld [vmem:[%s5] sm:$0xf]
    %v1548 = vld [vmem:[%s5 + $0x4] sm:$0xf]
    %v1549 = vld [vmem:[%s5 + $0x8] sm:$0xf]
    %v1550 = vld [vmem:[%s5 + $0xc] sm:$0xf]
    %v1551 = vld [vmem:[%s5 + $0x10] sm:$0xf]
    %v1552 = vld [vmem:[%s5 + $0x14] sm:$0xf]
    %v1553 = vld [vmem:[%s5 + $0x18] sm:$0xf]
    %v1554 = vld [vmem:[%s5 + $0x1c] sm:$0xf]
    %v1555 = vld [vmem:[%s5 + $0x20] sm:$0xf]
    %v1556 = vld [vmem:[%s5 + $0x24] sm:$0xf]
    %v1557 = vld [vmem:[%s5 + $0x28] sm:$0xf]
    %v1558 = vld [vmem:[%s5 + $0x2c] sm:$0xf]
    %v1559 = vld [vmem:[%s5 + $0x30] sm:$0xf]
    %v1560 = vld [vmem:[%s5 + $0x34] sm:$0xf]
    %v1561 = vld [vmem:[%s5 + $0x38] sm:$0xf]
    %v1562 = vld [vmem:[%s5 + $0x3c] sm:$0xf]
    %v1563 = vld [vmem:[%s5 + $0x40] sm:$0xf]
    %v1564 = vld [vmem:[%s5 + $0x44] sm:$0xf]
    %v1565 = vld [vmem:[%s5 + $0x48] sm:$0xf]
    %v1566 = vld [vmem:[%s5 + $0x4c] sm:$0xf]
    %v1567 = vld [vmem:[%s5 + $0x50] sm:$0xf]
    %v1568 = vld [vmem:[%s5 + $0x54] sm:$0xf]
    %v1569 = vld [vmem:[%s5 + $0x58] sm:$0xf]
    %v1570 = vld [vmem:[%s5 + $0x5c] sm:$0xf]
    %v1571 = vld [vmem:[%s5 + $0x60] sm:$0xf]
    %v1572 = vld [vmem:[%s5 + $0x64] sm:$0xf]
    %v1573 = vld [vmem:[%s5 + $0x68] sm:$0xf]
    %v1574 = vld [vmem:[%s5 + $0x6c] sm:$0xf]
    %v1575 = vld [vmem:[%s5 + $0x70] sm:$0xf]
    %v1576 = vld [vmem:[%s5 + $0x74] sm:$0xf]
    %v1577 = vld [vmem:[%s5 + $0x78] sm:$0xf]
    %v1578 = vld [vmem:[%s5 + $0x7c] sm:$0xf]
    %v1579 = vld [vmem:[%s5 + $0x80] sm:$0xf]
    %v1580 = vld [vmem:[%s5 + $0x84] sm:$0xf]
    %v1581 = vld [vmem:[%s5 + $0x88] sm:$0xf]
    %v1582 = vld [vmem:[%s5 + $0x8c] sm:$0xf]
    %v1583 = vld [vmem:[%s5 + $0x90] sm:$0xf]
    %v1584 = vld [vmem:[%s5 + $0x94] sm:$0xf]
    %v1585 = vld [vmem:[%s5 + $0x98] sm:$0xf]
    %v1586 = vld [vmem:[%s5 + $0x9c] sm:$0xf]
    %v1587 = vld [vmem:[%s5 + $0xa0] sm:$0xf]
    %v1588 = vld [vmem:[%s5 + $0xa4] sm:$0xf]
    %v1589 = vld [vmem:[%s5 + $0xa8] sm:$0xf]
    %v1590 = vld [vmem:[%s5 + $0xac] sm:$0xf]
    %v1591 = vld [vmem:[%s5 + $0xb0] sm:$0xf]
    %v1592 = vld [vmem:[%s5 + $0xb4] sm:$0xf]
    %v1593 = vld [vmem:[%s5 + $0xb8] sm:$0xf]
    %v1594 = vld [vmem:[%s5 + $0xbc] sm:$0xf]
    %v1595 = vld [vmem:[%s5 + $0xc0] sm:$0xf]
    %v1596 = vld [vmem:[%s5 + $0xc4] sm:$0xf]
    %v1597 = vld [vmem:[%s5 + $0xc8] sm:$0xf]
    %v1598 = vld [vmem:[%s5 + $0xcc] sm:$0xf]
    %v1599 = vld [vmem:[%s5 + $0xd0] sm:$0xf]
    %v1600 = vld [vmem:[%s5 + $0xd4] sm:$0xf]
    %v1601 = vld [vmem:[%s5 + $0xd8] sm:$0xf]
    %v1602 = vld [vmem:[%s5 + $0xdc] sm:$0xf]
    %v1603 = vld [vmem:[%s5 + $0xe0] sm:$0xf]
    %v1604 = vld [vmem:[%s5 + $0xe4] sm:$0xf]
    %v1605 = vld [vmem:[%s5 + $0xe8] sm:$0xf]
    %v1606 = vld [vmem:[%s5 + $0xec] sm:$0xf]
    %v1607 = vld [vmem:[%s5 + $0xf0] sm:$0xf]
    %v1608 = vld [vmem:[%s5 + $0xf4] sm:$0xf]
    %v1609 = vld [vmem:[%s5 + $0xf8] sm:$0xf]
    %v1610 = vld [vmem:[%s5 + $0xfc] sm:$0xf]
    %v1611 = vld [vmem:[%s6] sm:$0x1]
    %v1613 = vlaneseq
    %v1614 = vshrl.u32 %v1613, 7
    %v1615 = vsub.s32 0, %v1614
    %v1616 = vrot.slane %v1611, %v1615
    %v1682 = vunpack.c.l.b16 %v1547
    %v1683 = vunpack.c.l.b16 %v1548
    %v1684 = vunpack.c.l.b16 %v1549
    %v1685 = vunpack.c.l.b16 %v1550
    %v1686 = vunpack.c.l.b16 %v1551
    %v1687 = vunpack.c.l.b16 %v1552
    %v1688 = vunpack.c.l.b16 %v1553
    %v1689 = vunpack.c.l.b16 %v1554
    %v1690 = vunpack.c.l.b16 %v1555
    %v1691 = vunpack.c.l.b16 %v1556
    %v1692 = vunpack.c.l.b16 %v1557
    %v1693 = vunpack.c.l.b16 %v1558
    %v1694 = vunpack.c.l.b16 %v1559
    %v1695 = vunpack.c.l.b16 %v1560
    %v1696 = vunpack.c.l.b16 %v1561
    %v1697 = vunpack.c.l.b16 %v1562
    %v1698 = vunpack.c.l.b16 %v1563
    %v1699 = vunpack.c.l.b16 %v1564
    %v1700 = vunpack.c.l.b16 %v1565
    %v1701 = vunpack.c.l.b16 %v1566
    %v1702 = vunpack.c.l.b16 %v1567
    %v1703 = vunpack.c.l.b16 %v1568
    %v1704 = vunpack.c.l.b16 %v1569
    %v1705 = vunpack.c.l.b16 %v1570
    %v1706 = vunpack.c.l.b16 %v1571
    %v1707 = vunpack.c.l.b16 %v1572
    %v1708 = vunpack.c.l.b16 %v1573
    %v1709 = vunpack.c.l.b16 %v1574
    %v1710 = vunpack.c.l.b16 %v1575
    %v1711 = vunpack.c.l.b16 %v1576
    %v1712 = vunpack.c.l.b16 %v1577
    %v1713 = vunpack.c.l.b16 %v1578
    %v1714 = vunpack.c.l.b16 %v1579
    %v1715 = vunpack.c.l.b16 %v1580
    %v1716 = vunpack.c.l.b16 %v1581
    %v1717 = vunpack.c.l.b16 %v1582
    %v1718 = vunpack.c.l.b16 %v1583
    %v1719 = vunpack.c.l.b16 %v1584
    %v1720 = vunpack.c.l.b16 %v1585
    %v1721 = vunpack.c.l.b16 %v1586
    %v1722 = vunpack.c.l.b16 %v1587
    %v1723 = vunpack.c.l.b16 %v1588
    %v1724 = vunpack.c.l.b16 %v1589
    %v1725 = vunpack.c.l.b16 %v1590
    %v1726 = vunpack.c.l.b16 %v1591
    %v1727 = vunpack.c.l.b16 %v1592
    %v1728 = vunpack.c.l.b16 %v1593
    %v1729 = vunpack.c.l.b16 %v1594
    %v1730 = vunpack.c.l.b16 %v1595
    %v1731 = vunpack.c.l.b16 %v1596
    %v1732 = vunpack.c.l.b16 %v1597
    %v1733 = vunpack.c.l.b16 %v1598
    %v1734 = vunpack.c.l.b16 %v1599
    %v1735 = vunpack.c.l.b16 %v1600
    %v1736 = vunpack.c.l.b16 %v1601
    %v1737 = vunpack.c.l.b16 %v1602
    %v1738 = vunpack.c.l.b16 %v1603
    %v1739 = vunpack.c.l.b16 %v1604
    %v1740 = vunpack.c.l.b16 %v1605
    %v1741 = vunpack.c.l.b16 %v1606
    %v1742 = vunpack.c.l.b16 %v1607
    %v1743 = vunpack.c.l.b16 %v1608
    %v1744 = vunpack.c.l.b16 %v1609
    %v1745 = vunpack.c.l.b16 %v1610
    %v1746 = vpack.c.b16 %v1683, %v1682
    %v1747 = vpack.c.b16 %v1685, %v1684
    %v1748 = vpack.c.b16 %v1687, %v1686
    %v1749 = vpack.c.b16 %v1689, %v1688
    %v1750 = vpack.c.b16 %v1691, %v1690
    %v1751 = vpack.c.b16 %v1693, %v1692
    %v1752 = vpack.c.b16 %v1695, %v1694
    %v1753 = vpack.c.b16 %v1697, %v1696
    %v1754 = vpack.c.b16 %v1699, %v1698
    %v1755 = vpack.c.b16 %v1701, %v1700
    %v1756 = vpack.c.b16 %v1703, %v1702
    %v1757 = vpack.c.b16 %v1705, %v1704
    %v1758 = vpack.c.b16 %v1707, %v1706
    %v1759 = vpack.c.b16 %v1709, %v1708
    %v1760 = vpack.c.b16 %v1711, %v1710
    %v1761 = vpack.c.b16 %v1713, %v1712
    %v1762 = vpack.c.b16 %v1715, %v1714
    %v1763 = vpack.c.b16 %v1717, %v1716
    %v1764 = vpack.c.b16 %v1719, %v1718
    %v1765 = vpack.c.b16 %v1721, %v1720
    %v1766 = vpack.c.b16 %v1723, %v1722
    %v1767 = vpack.c.b16 %v1725, %v1724
    %v1768 = vpack.c.b16 %v1727, %v1726
    %v1769 = vpack.c.b16 %v1729, %v1728
    %v1770 = vpack.c.b16 %v1731, %v1730
    %v1771 = vpack.c.b16 %v1733, %v1732
    %v1772 = vpack.c.b16 %v1735, %v1734
    %v1773 = vpack.c.b16 %v1737, %v1736
    %v1774 = vpack.c.b16 %v1739, %v1738
    %v1775 = vpack.c.b16 %v1741, %v1740
    %v1776 = vpack.c.b16 %v1743, %v1742
    %v1777 = vpack.c.b16 %v1745, %v1744
    %1810 = vmatprep.subr.bf16.mxu0 0
    %1811 = vmatpush1.bf16.msra.mxu0 %v1746
    %1812 = vmatprep.subr.bf16.mxu0 0
    %1813 = vmatpush1.bf16.msra.mxu0 %v1747
    %1814 = vmatprep.subr.bf16.mxu0 0
    %1815 = vmatpush1.bf16.msra.mxu0 %v1748
    %1816 = vmatprep.subr.bf16.mxu0 0
    %1817 = vmatpush1.bf16.msra.mxu0 %v1749
    %1818 = vmatprep.subr.bf16.mxu0 0
    %1819 = vmatpush1.bf16.msra.mxu0 %v1750
    %1820 = vmatprep.subr.bf16.mxu0 0
    %1821 = vmatpush1.bf16.msra.mxu0 %v1751
    %1822 = vmatprep.subr.bf16.mxu0 0
    %1823 = vmatpush1.bf16.msra.mxu0 %v1752
    %1824 = vmatprep.subr.bf16.mxu0 0
    %1825 = vmatpush1.bf16.msra.mxu0 %v1753
    %1826 = vmatprep.subr.bf16.mxu0 0
    %1827 = vmatpush1.bf16.msra.mxu0 %v1754
    %1828 = vmatprep.subr.bf16.mxu0 0
    %1829 = vmatpush1.bf16.msra.mxu0 %v1755
    %1830 = vmatprep.subr.bf16.mxu0 0
    %1831 = vmatpush1.bf16.msra.mxu0 %v1756
    %1832 = vmatprep.subr.bf16.mxu0 0
    %1833 = vmatpush1.bf16.msra.mxu0 %v1757
    %1834 = vmatprep.subr.bf16.mxu0 0
    %1835 = vmatpush1.bf16.msra.mxu0 %v1758
    %1836 = vmatprep.subr.bf16.mxu0 0
    %1837 = vmatpush1.bf16.msra.mxu0 %v1759
    %1838 = vmatprep.subr.bf16.mxu0 0
    %1839 = vmatpush1.bf16.msra.mxu0 %v1760
    %1840 = vmatprep.subr.bf16.mxu0 0
    %1841 = vmatpush1.bf16.msra.mxu0 %v1761
    %1842 = vmatprep.mubr.bf16.mxu0 %v1542
    %1843 = vmatmul.mubr.bf16.gmra.mrb[0].mxu0 %v1539
    %v1844 = vpop.f32.mrb[0].mxu0
    %v1845 = vadd.f32 %v1616, %v1844
    %v1846 = vpop.f32.mrb[0].mxu0
    %v1847 = vpop.f32.mrb[0].mxu0
    %v1848 = vpop.f32.mrb[0].mxu0
    %1849 = vdwg.mxu0
    %1850 = vmatprep.subr.bf16.mxu0 0
    %1851 = vmatpush1.bf16.msra.mxu0 %v1762
    %1852 = vmatprep.subr.bf16.mxu0 0
    %1853 = vmatpush1.bf16.msra.mxu0 %v1763
    %1854 = vmatprep.subr.bf16.mxu0 0
    %1855 = vmatpush1.bf16.msra.mxu0 %v1764
    %1856 = vmatprep.subr.bf16.mxu0 0
    %1857 = vmatpush1.bf16.msra.mxu0 %v1765
    %1858 = vmatprep.subr.bf16.mxu0 0
    %1859 = vmatpush1.bf16.msra.mxu0 %v1766
    %1860 = vmatprep.subr.bf16.mxu0 0
    %1861 = vmatpush1.bf16.msra.mxu0 %v1767
    %1862 = vmatprep.subr.bf16.mxu0 0
    %1863 = vmatpush1.bf16.msra.mxu0 %v1768
    %1864 = vmatprep.subr.bf16.mxu0 0
    %1865 = vmatpush1.bf16.msra.mxu0 %v1769
    %1866 = vmatprep.subr.bf16.mxu0 0
    %1867 = vmatpush1.bf16.msra.mxu0 %v1770
    %1868 = vmatprep.subr.bf16.mxu0 0
    %1869 = vmatpush1.bf16.msra.mxu0 %v1771
    %1870 = vmatprep.subr.bf16.mxu0 0
    %1871 = vmatpush1.bf16.msra.mxu0 %v1772
    %1872 = vmatprep.subr.bf16.mxu0 0
    %1873 = vmatpush1.bf16.msra.mxu0 %v1773
    %1874 = vmatprep.subr.bf16.mxu0 0
    %1875 = vmatpush1.bf16.msra.mxu0 %v1774
    %1876 = vmatprep.subr.bf16.mxu0 0
    %1877 = vmatpush1.bf16.msra.mxu0 %v1775
    %1878 = vmatprep.subr.bf16.mxu0 0
    %1879 = vmatpush1.bf16.msra.mxu0 %v1776
    %1880 = vmatprep.subr.bf16.mxu0 0
    %1881 = vmatpush1.bf16.msra.mxu0 %v1777
    %1882 = vmatprep.mubr.bf16.mxu0 %v1545
    %1883 = vmatmul.mubr.bf16.gmra.mrb[0].mxu0 %v1540
    %v1884 = vpop.f32.mrb[0].mxu0
    %v1885 = vadd.f32 %v1845, %v1884
    %v1886 = vpop.f32.mrb[0].mxu0
    %v1887 = vpop.f32.mrb[0].mxu0
    %v1888 = vpop.f32.mrb[0].mxu0
    %1889 = vdwg.mxu0
    %v1890 = vmax.f32 %v1885, 0.0
    %v1891 = vpack.c.bf16 %v1890, %v1890
    %v1892 = vld [vmem:[%s7] sm:$0xf]
    %v1893 = vld [vmem:[%s7 + $0x4] sm:$0xf]
    %v1894 = vld [vmem:[%s7 + $0x8] sm:$0xf]
    %v1895 = vld [vmem:[%s7 + $0xc] sm:$0xf]
    %v1896 = vld [vmem:[%s7 + $0x10] sm:$0xf]
    %v1897 = vld [vmem:[%s7 + $0x14] sm:$0xf]
    %v1898 = vld [vmem:[%s7 + $0x18] sm:$0xf]
    %v1899 = vld [vmem:[%s7 + $0x1c] sm:$0xf]
    %v1900 = vld [vmem:[%s7 + $0x20] sm:$0xf]
    %v1901 = vld [vmem:[%s7 + $0x24] sm:$0xf]
    %v1902 = vld [vmem:[%s7 + $0x28] sm:$0xf]
    %v1903 = vld [vmem:[%s7 + $0x2c] sm:$0xf]
    %v1904 = vld [vmem:[%s7 + $0x30] sm:$0xf]
    %v1905 = vld [vmem:[%s7 + $0x34] sm:$0xf]
    %v1906 = vld [vmem:[%s7 + $0x38] sm:$0xf]
    %v1907 = vld [vmem:[%s8] sm:$0x1]
    %v1909 = vlaneseq
    %v1910 = vshrl.u32 %v1909, 7
    %v1911 = vsub.s32 0, %v1910
    %v1912 = vrot.slane %v1907, %v1911
    %v1929 = vunpack.c.l.b16 %v1892
    %v1930 = vunpack.c.l.b16 %v1893
    %v1931 = vunpack.c.l.b16 %v1894
    %v1932 = vunpack.c.l.b16 %v1895
    %v1933 = vunpack.c.l.b16 %v1896
    %v1934 = vunpack.c.l.b16 %v1897
    %v1935 = vunpack.c.l.b16 %v1898
    %v1936 = vunpack.c.l.b16 %v1899
    %v1937 = vunpack.c.l.b16 %v1900
    %v1938 = vunpack.c.l.b16 %v1901
    %v1939 = vunpack.c.l.b16 %v1902
    %v1940 = vunpack.c.l.b16 %v1903
    %v1941 = vunpack.c.l.b16 %v1904
    %v1942 = vunpack.c.l.b16 %v1905
    %v1943 = vunpack.c.l.b16 %v1906
    %v1944 = vpack.c.b16 %v1930, %v1929
    %v1945 = vpack.c.b16 %v1932, %v1931
    %v1946 = vpack.c.b16 %v1934, %v1933
    %v1947 = vpack.c.b16 %v1936, %v1935
    %v1948 = vpack.c.b16 %v1938, %v1937
    %v1949 = vpack.c.b16 %v1940, %v1939
    %v1950 = vpack.c.b16 %v1942, %v1941
    %v1951 = vpack.c.b16 %v1943, %v1943
    %vm1959 = vcmask 982016
    %v1961 = vsel %vm1959, %v1891, 0
    %vm1963 = vcmask 1043456
    %v1965 = vsel %vm1963, %v1951, 0
    %1967 = vmatprep.subr.bf16.mxu0 0
    %1968 = vmatpush1.bf16.msra.mxu0 %v1944
    %1969 = vmatprep.subr.bf16.mxu0 0
    %1970 = vmatpush1.bf16.msra.mxu0 %v1945
    %1971 = vmatprep.subr.bf16.mxu0 0
    %1972 = vmatpush1.bf16.msra.mxu0 %v1946
    %1973 = vmatprep.subr.bf16.mxu0 0
    %1974 = vmatpush1.bf16.msra.mxu0 %v1947
    %1975 = vmatprep.subr.bf16.mxu0 0
    %1976 = vmatpush1.bf16.msra.mxu0 %v1948
    %1977 = vmatprep.subr.bf16.mxu0 0
    %1978 = vmatpush1.bf16.msra.mxu0 %v1949
    %1979 = vmatprep.subr.bf16.mxu0 0
    %1980 = vmatpush1.bf16.msra.mxu0 %v1950
    %1981 = vmatprep.subr.bf16.mxu0 0
    %1982 = vmatpush1.bf16.msra.mxu0 %v1965
    %1983 = vmatprep.subr.bf16.mxu0 0
    %1984 = vmatpush1.bf16.msra.mxu0 0
    %1985 = vmatprep.subr.bf16.mxu0 0
    %1986 = vmatpush1.bf16.msra.mxu0 0
    %1987 = vmatprep.subr.bf16.mxu0 0
    %1988 = vmatpush1.bf16.msra.mxu0 0
    %1989 = vmatprep.subr.bf16.mxu0 0
    %1990 = vmatpush1.bf16.msra.mxu0 0
    %1991 = vmatprep.subr.bf16.mxu0 0
    %1992 = vmatpush1.bf16.msra.mxu0 0
    %1993 = vmatprep.subr.bf16.mxu0 0
    %1994 = vmatpush1.bf16.msra.mxu0 0
    %1995 = vmatprep.subr.bf16.mxu0 0
    %1996 = vmatpush1.bf16.msra.mxu0 0
    %1997 = vmatprep.subr.bf16.mxu0 0
    %1998 = vmatpush1.bf16.msra.mxu0 0
    %1999 = vmatprep.mubr.bf16.mxu0 0
    %2000 = vmatmul.mubr.bf16.gmra.mrb[0].mxu0 %v1961
    %v2001 = vpop.f32.mrb[0].mxu0
    %v2002 = vadd.f32 %v1912, %v2001
    %v2003 = vpop.f32.mrb[0].mxu0
    %v2004 = vpop.f32.mrb[0].mxu0
    %v2005 = vpop.f32.mrb[0].mxu0
    %2006 = vdwg.mxu0
    %v2007 = vmax.f32 %v2002, 0.0
    %v2008 = vpack.c.bf16 %v2007, %v2007
    %v2009 = vld [vmem:[%s9] sm:$0xf]
    %v2010 = vld [vmem:[%s9 + $0x4] sm:$0xf]
    %v2011 = vld [vmem:[%s9 + $0x8] sm:$0xf]
    %v2012 = vld [vmem:[%s9 + $0xc] sm:$0xf]
    %v2013 = vld [vmem:[%s9 + $0x10] sm:$0xf]
    %v2014 = vld [vmem:[%s9 + $0x14] sm:$0xf]
    %v2015 = vld [vmem:[%s9 + $0x18] sm:$0xf]
    %v2016 = vld [vmem:[%s9 + $0x1c] sm:$0xf]
    %v2017 = vld [vmem:[%s9 + $0x20] sm:$0xf]
    %v2018 = vld [vmem:[%s9 + $0x24] sm:$0xf]
    %v2019 = vld [vmem:[%s9 + $0x28] sm:$0x3]
    %v2020 = vld [vmem:[%s10] sm:$0x1]
    %v2022 = vlaneseq
    %v2023 = vshrl.u32 %v2022, 7
    %v2024 = vsub.s32 0, %v2023
    %v2025 = vrot.slane %v2020, %v2024
    %v2038 = vunpack.c.l.b16 %v2009
    %v2039 = vunpack.c.l.b16 %v2010
    %v2040 = vunpack.c.l.b16 %v2011
    %v2041 = vunpack.c.l.b16 %v2012
    %v2042 = vunpack.c.l.b16 %v2013
    %v2043 = vunpack.c.l.b16 %v2014
    %v2044 = vunpack.c.l.b16 %v2015
    %v2045 = vunpack.c.l.b16 %v2016
    %v2046 = vunpack.c.l.b16 %v2017
    %v2047 = vunpack.c.l.b16 %v2018
    %v2048 = vunpack.c.l.b16 %v2019
    %v2049 = vpack.c.b16 %v2039, %v2038
    %v2050 = vpack.c.b16 %v2041, %v2040
    %v2051 = vpack.c.b16 %v2043, %v2042
    %v2052 = vpack.c.b16 %v2045, %v2044
    %v2053 = vpack.c.b16 %v2047, %v2046
    %v2054 = vpack.c.b16 %v2048, %v2048
    %v2061 = vsel %vm322, %v2008, 0
    %vm2063 = vcmask 1041408
    %v2065 = vsel %vm2063, %v2054, 0
    %2067 = vmatprep.subr.bf16.mxu0 0
    %2068 = vmatpush1.bf16.msra.mxu0 %v2049
    %2069 = vmatprep.subr.bf16.mxu0 0
    %2070 = vmatpush1.bf16.msra.mxu0 %v2050
    %2071 = vmatprep.subr.bf16.mxu0 0
    %2072 = vmatpush1.bf16.msra.mxu0 %v2051
    %2073 = vmatprep.subr.bf16.mxu0 0
    %2074 = vmatpush1.bf16.msra.mxu0 %v2052
    %2075 = vmatprep.subr.bf16.mxu0 0
    %2076 = vmatpush1.bf16.msra.mxu0 %v2053
    %2077 = vmatprep.subr.bf16.mxu0 0
    %2078 = vmatpush1.bf16.msra.mxu0 %v2065
    %2079 = vmatprep.subr.bf16.mxu0 0
    %2080 = vmatpush1.bf16.msra.mxu0 0
    %2081 = vmatprep.subr.bf16.mxu0 0
    %2082 = vmatpush1.bf16.msra.mxu0 0
    %2083 = vmatprep.subr.bf16.mxu0 0
    %2084 = vmatpush1.bf16.msra.mxu0 0
    %2085 = vmatprep.subr.bf16.mxu0 0
    %2086 = vmatpush1.bf16.msra.mxu0 0
    %2087 = vmatprep.subr.bf16.mxu0 0
    %2088 = vmatpush1.bf16.msra.mxu0 0
    %2089 = vmatprep.subr.bf16.mxu0 0
    %2090 = vmatpush1.bf16.msra.mxu0 0
    %2091 = vmatprep.subr.bf16.mxu0 0
    %2092 = vmatpush1.bf16.msra.mxu0 0
    %2093 = vmatprep.subr.bf16.mxu0 0
    %2094 = vmatpush1.bf16.msra.mxu0 0
    %2095 = vmatprep.subr.bf16.mxu0 0
    %2096 = vmatpush1.bf16.msra.mxu0 0
    %2097 = vmatprep.subr.bf16.mxu0 0
    %2098 = vmatpush1.bf16.msra.mxu0 0
    %2099 = vmatprep.mubr.bf16.mxu0 0
    %2100 = vmatmul.mubr.bf16.gmra.mrb[0].mxu0 %v2061
    %v2101 = vpop.f32.mrb[0].mxu0
    %v2102 = vadd.f32 %v2025, %v2101
    %v2103 = vpop.f32.mrb[0].mxu0
    %v2104 = vpop.f32.mrb[0].mxu0
    %v2105 = vpop.f32.mrb[0].mxu0
    %2106 = vdwg.mxu0
    %2107 = vst [vmem:[%s11] sm:$0xff] %v2102
    // Predicated region
    $region50: #{femnist_forward.1} parent=1 // pred_check
      _
    $region51: #{femnist_forward.1} parent=1 // pred_check_branch
      %2109 = sbr.rel (0) target = $region53
    $region52: #{femnist_forward.1} parent=1 // pred_region
      _
    $region53: #{femnist_forward.1} parent=1 // pred_fallthru
      _
    // Predicated region
    $region54: #{femnist_forward.1} parent=1 // pred_check
      _
    $region55: #{femnist_forward.1} parent=1 // pred_check_branch
      %2111 = sbr.rel (0) target = $region57
    $region56: #{femnist_forward.1} parent=1 // pred_region
      _
    $region57: #{femnist_forward.1} parent=1 // pred_fallthru
      _
    %2112 = vsyncpa [#allocation3], 1

</llo_original>
